<compile_context>
chip_gen: v5e
topology: v5e:2x2
jax: 0.10.0
libtpu: 0.0.40
codegen_flags: <defaults>
</compile_context>

<pallas_src>
import functools

import jax
import jax.numpy as jnp
from jax import lax
from jax.experimental import pallas as pl
from jax.experimental.pallas import tpu as pltpu


_INV_SQRT2 = 0.7071067811865476
_LANE = 128


def _round_up(n, m):
    return ((n + m - 1) // m) * m


def _gelu_exact(t):
    # Matches torch.nn.GELU() default (erf formulation).
    # TODO(synk): if exact erf parity is not required, the tanh approximation
    # would move the transcendental onto the EUP slot (off the VALU).
    return 0.5 * t * (1.0 + lax.erf(t * _INV_SQRT2))


def _cube_re_kernel(B, S, H, M, L, O, LJ, LQ,
                    x_ref, wbig_ref, bp1_ref, bp2_ref, wf_ref, bf_ref,
                    joint_ref, q_ref):
    """Single-invocation kernel (no grid) over the whole (small) batch.

    x_ref     : (B, S, H)  bf16   encoder reprs
    wbig_ref  : (H, 4M+O*M) bf16  [pair head | pair tail | pair2 head | pair2 tail | U^T]
                                  where U^T[h, o*M+m] = U[o, m, h]
    bp1/bp2   : (1, M) f32        pair_mlp / pair2_mlp biases
    wf_ref    : (M, LJ) bf16      final_mlp weight, zero-padded L -> LJ (lane-dense)
    bf_ref    : (1, LJ) f32       final_mlp bias, zero-padded
    joint_ref : (B, S*S, LJ) f32  joint_ref[b, x*S+y, l]   == joint_score[b,x,y,l]
    q_ref     : (B, S*S, LQ) f32  q_ref[b, x*S+y, o*S+z]   == q_score[b,x,y,z,o]
                                  (columns >= O*S are zero padding)
    """
    f32 = jnp.float32
    bf16 = jnp.bfloat16

    x2d = x_ref[...].reshape(B * S, H)                                   # (B*S, H)

    # (1) ONE fused, lane-dense MXU push: all four pair-MLP halves plus all O
    #     bilinear value blocks in a single matmul (f32 accumulation).
    proj = jnp.dot(x2d, wbig_ref[...], preferred_element_type=f32)       # (B*S, 4M+O*M)
    p3 = proj[:, :4 * M].reshape(B, S, 4 * M)
    v_all = proj[:, 4 * M:].reshape(B, S, O * M)                         # (B, S, O*M)

    # (2) biases hoisted to (B,S,M) before the (B,S,S,M) broadcast (S× fewer adds).
    a1 = p3[:, :, 0 * M:1 * M] + bp1_ref[...]   # pair_mlp,  head half (+bias)
    b1 = p3[:, :, 1 * M:2 * M]                  # pair_mlp,  tail half
    a2 = p3[:, :, 2 * M:3 * M] + bp2_ref[...]   # pair2_mlp, head half (+bias)
    b2 = p3[:, :, 3 * M:4 * M]                  # pair2_mlp, tail half

    h1 = _gelu_exact(a1[:, :, None, :] + b1[:, None, :, :])             # (B,S,S,M) f32
    h2 = _gelu_exact(a2[:, :, None, :] + b2[:, None, :, :])             # (B,S,S,M) f32

    # (3) joint score: ONE (B*S*S, M) @ (M, LJ) matmul, bf16 MXU inputs, f32
    #     accumulation, lane-dense (LJ = multiple of 128) unmasked store.
    h1f = h1.reshape(B * S * S, M).astype(bf16)
    joint = jnp.dot(h1f, wf_ref[...], preferred_element_type=f32) + bf_ref[...]
    joint_ref[...] = joint.reshape(B, S * S, LJ)

    # (4) quintuplet score: restack the O value blocks along rows once for the
    #     whole batch (static lane slices + sublane concat; no last-dim
    #     reshape), zero-pad rows O*S -> LQ so the output columns are
    #     lane-dense, then ONE batched (B,S*S,M) x (B,LQ,M)^T contraction and
    #     a single full-ref store.
    v3 = jnp.concatenate([v_all[:, :, o * M:(o + 1) * M] for o in range(O)],
                         axis=1).astype(bf16)                            # (B, O*S, M)
    v3p = jnp.concatenate([v3, jnp.zeros((B, LQ - O * S, M), bf16)],
                          axis=1)                                        # (B, LQ, M)
    h2f = h2.reshape(B, S * S, M).astype(bf16)
    q_ref[...] = lax.dot_general(h2f, v3p, (((2,), (2,)), ((0,), (0,))),
                                 preferred_element_type=f32)             # (B, S*S, LQ)


def cube_re_scores(reprs, params, *, compute_dtype=jnp.bfloat16):
    """Pallas wrapper: returns (joint_score [B,S,S,L], q_score [B,S,S,S,O])."""
    B, S, H = reprs.shape
    M = params["wh1"].shape[1]
    L = params["wf"].shape[1]
    O = params["U"].shape[0]
    f32 = jnp.float32
    LJ = _round_up(L, _LANE)        # lane-dense joint-score slab width
    LQ = _round_up(O * S, _LANE)    # lane-dense quintuplet-score slab width

    # Fuse the four pair-MLP half-weights and the pre-transposed U into one
    # lane-dense (H, 4M + O*M) slab so the kernel needs a single input matmul.
    u_t = jnp.transpose(params["U"], (2, 0, 1)).reshape(H, O * M)        # (H, O*M)
    w_big = jnp.concatenate([params["wh1"], params["wt1"],
                             params["wh2"], params["wt2"], u_t],
                            axis=1).astype(compute_dtype)                # (H, 4M+O*M)

    # final_mlp weight/bias zero-padded to LJ columns (lane-dense output store).
    wf_pad = jnp.zeros((M, LJ), f32).at[:, :L].set(params["wf"]).astype(compute_dtype)
    bf_pad = jnp.zeros((1, LJ), f32).at[:, :L].set(params["bf"])
    x_c = reprs.astype(compute_dtype)

    kernel = functools.partial(_cube_re_kernel, B, S, H, M, L, O, LJ, LQ)
    vmem = pl.BlockSpec(memory_space=pltpu.MemorySpace.VMEM)

    # No grid: whole problem (tens of KiB) lives in VMEM for the single
    # invocation; avoids the double-buffering / per-step overhead a synthetic
    # grid=(1,) pipeline would add.
    joint_slab, q_slab = pl.pallas_call(
        kernel,
        in_specs=[vmem] * 6,
        out_specs=(vmem, vmem),
        out_shape=(jax.ShapeDtypeStruct((B, S * S, LJ), f32),
                   jax.ShapeDtypeStruct((B, S * S, LQ), f32)),
    )(x_c, w_big,
      params["bp1"].astype(f32), params["bp2"].astype(f32),
      wf_pad, bf_pad)

    # Lane-dense kernel slabs -> PyTorch layouts.  IMPORTANT: slice the padded
    # columns away BEFORE any softmax / cross-entropy downstream.
    joint_score = joint_slab[:, :, :L].reshape(B, S, S, L)
    q_score = (q_slab[:, :, :O * S].reshape(B, S, S, O, S)
               .transpose(0, 1, 2, 4, 3))
    return joint_score, q_score


# ----------------------------- plain-JAX glue ------------------------------

def masked_cross_entropy(logits, labels, mask):
    # Equivalent to torch CrossEntropyLoss (mean) over boolean-masked positions.
    logp = jax.nn.log_softmax(logits, axis=-1)
    nll = -jnp.take_along_axis(logp, labels[..., None], axis=-1)[..., 0]
    m = mask.astype(jnp.float32)
    return jnp.sum(nll * m) / jnp.maximum(jnp.sum(m), 1.0)


def cube_re_forward(batch_inputs, params, *, compute_dtype=jnp.bfloat16):
    reprs = batch_inputs["seq_encoder_reprs"]
    joint_score, q_score = cube_re_scores(reprs, params,
                                          compute_dtype=compute_dtype)

    jm = batch_inputs["joint_label_matrix_mask"]
    qm = batch_inputs["quintuplet_matrix_mask"]

    element_loss = masked_cross_entropy(joint_score,
                                        batch_inputs["joint_label_matrix"], jm)
    q_loss = masked_cross_entropy(q_score,
                                  batch_inputs["quintuplet_matrix"], qm)

    results = {
        "element_loss": element_loss,
        "q_loss": q_loss,
        "loss": element_loss + q_loss,
        "joint_score": joint_score,
        "q_score": q_score,
    }

    # eval-mode predictions: softmax * mask, then argmax
    norm_joint = jax.nn.softmax(joint_score, -1) * jm[..., None].astype(jnp.float32)
    norm_q = jax.nn.softmax(q_score, -1) * qm[..., None].astype(jnp.float32)
    results["joint_label_preds"] = jnp.argmax(norm_joint, axis=-1)
    results["quintuplet_preds"] = jnp.argmax(norm_q, axis=-1)
    # TODO(synk): soft_joint_decoding / decode_nonzero_cuboids (cuboid merging,
    # Python control flow on CPU) and the prune_topk branch have no Pallas
    # equivalent and are omitted.
    return results


def reference_scores(reprs, params, *, compute_dtype=jnp.bfloat16):
    """Pure-JAX reference mirroring the PyTorch forward math.  The same bf16
    rounding the kernel applies at its MXU inputs (encoder reprs / weights,
    the post-GELU hiddens, and the bilinear value tensor) is applied here, so
    results match to f32 accumulation-order noise."""
    f32 = jnp.float32
    rnd = lambda a: a.astype(compute_dtype).astype(f32)
    B, S, H = reprs.shape
    x = rnd(reprs)
    W_pair = jnp.concatenate([rnd(params["wh1"]), rnd(params["wt1"])], axis=0)
    W_pair2 = jnp.concatenate([rnd(params["wh2"]), rnd(params["wt2"])], axis=0)
    head = jnp.broadcast_to(x[:, :, None, :], (B, S, S, H))
    tail = jnp.broadcast_to(x[:, None, :, :], (B, S, S, H))
    pair_in = jnp.concatenate([head, tail], axis=-1)                     # (B,S,S,2H)
    pair = _gelu_exact(pair_in @ W_pair + params["bp1"][0])
    joint = rnd(pair) @ rnd(params["wf"]) + params["bf"][0]
    pair2 = _gelu_exact(pair_in @ W_pair2 + params["bp2"][0])
    value = jnp.einsum("oij,bzj->bzoi", rnd(params["U"]), x)             # (B,S,O,M)
    q = jnp.einsum("bxyi,bzoi->bxyzo", rnd(pair2), rnd(value))
    return joint, q


# ---------------------------------- main -----------------------------------

if __name__ == "__main__":
    B, S, H = 2, 8, 32        # batch, seq_len, encoder hidden size
    M = 32                    # cfg.mlp_hidden_size
    L = 10                    # vocab size of 'ent_rel_id' (final_mlp out)
    O = 6                     # ent_rel_file['q_num_logits']

    key = jax.random.PRNGKey(0)
    ks = jax.random.split(key, 12)

    params = {
        "wh1": jax.random.normal(ks[0], (H, M), jnp.float32) * 0.1,
        "wt1": jax.random.normal(ks[1], (H, M), jnp.float32) * 0.1,
        "bp1": jax.random.normal(ks[2], (1, M), jnp.float32) * 0.1,
        "wf":  jax.random.normal(ks[3], (M, L), jnp.float32) * 0.1,
        "bf":  jax.random.normal(ks[4], (1, L), jnp.float32) * 0.1,
        "wh2": jax.random.normal(ks[5], (H, M), jnp.float32) * 0.1,
        "wt2": jax.random.normal(ks[6], (H, M), jnp.float32) * 0.1,
        "bp2": jax.random.normal(ks[7], (1, M), jnp.float32) * 0.1,
        # NOTE: the original module zero-initializes U; use a deterministic
        # random init here so the bilinear path is exercised.
        "U":   jax.random.normal(ks[8], (O, M, H), jnp.float32) * 0.1,
    }

    reprs = jax.random.normal(ks[9], (B, S, H), jnp.float32)
    batch_inputs = {
        "seq_encoder_reprs": reprs,
        "joint_label_matrix": jax.random.randint(ks[10], (B, S, S), 0, L),
        "joint_label_matrix_mask": jnp.ones((B, S, S), jnp.bool_),
        "quintuplet_matrix": jax.random.randint(ks[11], (B, S, S, S), 0, O),
        "quintuplet_matrix_mask": jnp.ones((B, S, S, S), jnp.bool_),
    }

    results = cube_re_forward(batch_inputs, params)
    jax.block_until_ready(results["loss"])

    # correctness check vs pure-JAX reference (same bf16 rounding points)
    ref_joint, ref_q = reference_scores(reprs, params)
    assert results["joint_score"].shape == (B, S, S, L)
    assert results["q_score"].shape == (B, S, S, S, O)
    assert jnp.allclose(results["joint_score"], ref_joint, rtol=2e-2, atol=2e-2)
    assert jnp.allclose(results["q_score"], ref_q, rtol=2e-2, atol=2e-2)

    print("KERNEL_OK")
</pallas_src>

<mosaic_0001>
module attributes {stable_mosaic.version = 11 : i64} {
  func.func @_cube_re_kernel(%arg0: memref<2x8x32xbf16, #tpu.memory_space<vmem>>, %arg1: memref<32x320xbf16, #tpu.memory_space<vmem>>, %arg2: memref<1x32xf32, #tpu.memory_space<vmem>>, %arg3: memref<1x32xf32, #tpu.memory_space<vmem>>, %arg4: memref<32x128xbf16, #tpu.memory_space<vmem>>, %arg5: memref<1x128xf32, #tpu.memory_space<vmem>>, %arg6: memref<2x64x128xf32, #tpu.memory_space<vmem>>, %arg7: memref<2x64x128xf32, #tpu.memory_space<vmem>>) attributes {dimension_semantics = [], scalar_prefetch = 0 : i64, scratch_operands = 0 : i64, tpu.core_type = #tpu.core_type<tc>} {
    %c0 = arith.constant 0 : index
    %c0_0 = arith.constant 0 : index
    %c0_1 = arith.constant 0 : index
    %0 = vector.load %arg0[%c0, %c0_0, %c0_1] : memref<2x8x32xbf16, #tpu.memory_space<vmem>>, vector<2x8x32xbf16>
    %1 = vector.shape_cast %0 : vector<2x8x32xbf16> to vector<16x32xbf16>
    %c0_2 = arith.constant 0 : index
    %c0_3 = arith.constant 0 : index
    %2 = vector.load %arg1[%c0_2, %c0_3] : memref<32x320xbf16, #tpu.memory_space<vmem>>, vector<32x320xbf16>
    %cst = arith.constant dense<0.000000e+00> : vector<16x320xf32>
    %3 = tpu.matmul %1, %2, %cst {dimension_numbers = #tpu.dot_dimension_numbers<[1], [0], [0], [1], [0, 0, 1, 1], [], []>} : vector<16x32xbf16>, vector<32x320xbf16>, vector<16x320xf32> -> vector<16x320xf32>
    %4 = vector.extract_strided_slice %3 {offsets = [0, 0], sizes = [16, 128], strides = [1, 1]} : vector<16x320xf32> to vector<16x128xf32>
    %5 = vector.shape_cast %4 : vector<16x128xf32> to vector<2x8x128xf32>
    %6 = vector.extract_strided_slice %3 {offsets = [0, 128], sizes = [16, 192], strides = [1, 1]} : vector<16x320xf32> to vector<16x192xf32>
    %7 = vector.shape_cast %6 : vector<16x192xf32> to vector<2x8x192xf32>
    %8 = vector.extract_strided_slice %5 {offsets = [0, 0, 0], sizes = [2, 8, 32], strides = [1, 1, 1]} : vector<2x8x128xf32> to vector<2x8x32xf32>
    %c0_4 = arith.constant 0 : index
    %c0_5 = arith.constant 0 : index
    %9 = vector.load %arg2[%c0_4, %c0_5] : memref<1x32xf32, #tpu.memory_space<vmem>>, vector<1x32xf32>
    %10 = vector.shape_cast %9 : vector<1x32xf32> to vector<1x1x32xf32>
    %11 = vector.broadcast %10 : vector<1x1x32xf32> to vector<2x8x32xf32>
    %12 = arith.addf %8, %11 : vector<2x8x32xf32>
    %13 = vector.extract_strided_slice %5 {offsets = [0, 0, 32], sizes = [2, 8, 32], strides = [1, 1, 1]} : vector<2x8x128xf32> to vector<2x8x32xf32>
    %14 = vector.extract_strided_slice %5 {offsets = [0, 0, 64], sizes = [2, 8, 32], strides = [1, 1, 1]} : vector<2x8x128xf32> to vector<2x8x32xf32>
    %c0_6 = arith.constant 0 : index
    %c0_7 = arith.constant 0 : index
    %15 = vector.load %arg3[%c0_6, %c0_7] : memref<1x32xf32, #tpu.memory_space<vmem>>, vector<1x32xf32>
    %16 = vector.shape_cast %15 : vector<1x32xf32> to vector<1x1x32xf32>
    %17 = vector.broadcast %16 : vector<1x1x32xf32> to vector<2x8x32xf32>
    %18 = arith.addf %14, %17 : vector<2x8x32xf32>
    %19 = vector.extract_strided_slice %5 {offsets = [0, 0, 96], sizes = [2, 8, 32], strides = [1, 1, 1]} : vector<2x8x128xf32> to vector<2x8x32xf32>
    %20 = vector.shape_cast %12 : vector<2x8x32xf32> to vector<2x8x1x32xf32>
    %21 = vector.shape_cast %13 : vector<2x8x32xf32> to vector<2x1x8x32xf32>
    %22 = vector.broadcast %20 : vector<2x8x1x32xf32> to vector<2x8x8x32xf32>
    %23 = vector.broadcast %21 : vector<2x1x8x32xf32> to vector<2x8x8x32xf32>
    %24 = arith.addf %22, %23 : vector<2x8x8x32xf32>
    %cst_8 = arith.constant 5.000000e-01 : f32
    %25 = vector.broadcast %cst_8 : f32 to vector<2x8x8x32xf32>
    %26 = arith.mulf %25, %24 : vector<2x8x8x32xf32>
    %cst_9 = arith.constant 0.707106769 : f32
    %27 = vector.broadcast %cst_9 : f32 to vector<2x8x8x32xf32>
    %28 = arith.mulf %24, %27 : vector<2x8x8x32xf32>
    %29 = math.erf %28 : vector<2x8x8x32xf32>
    %cst_10 = arith.constant 1.000000e+00 : f32
    %30 = vector.broadcast %cst_10 : f32 to vector<2x8x8x32xf32>
    %31 = arith.addf %30, %29 : vector<2x8x8x32xf32>
    %32 = arith.mulf %26, %31 : vector<2x8x8x32xf32>
    %33 = vector.shape_cast %18 : vector<2x8x32xf32> to vector<2x8x1x32xf32>
    %34 = vector.shape_cast %19 : vector<2x8x32xf32> to vector<2x1x8x32xf32>
    %35 = vector.broadcast %33 : vector<2x8x1x32xf32> to vector<2x8x8x32xf32>
    %36 = vector.broadcast %34 : vector<2x1x8x32xf32> to vector<2x8x8x32xf32>
    %37 = arith.addf %35, %36 : vector<2x8x8x32xf32>
    %cst_11 = arith.constant 5.000000e-01 : f32
    %38 = vector.broadcast %cst_11 : f32 to vector<2x8x8x32xf32>
    %39 = arith.mulf %38, %37 : vector<2x8x8x32xf32>
    %cst_12 = arith.constant 0.707106769 : f32
    %40 = vector.broadcast %cst_12 : f32 to vector<2x8x8x32xf32>
    %41 = arith.mulf %37, %40 : vector<2x8x8x32xf32>
    %42 = math.erf %41 : vector<2x8x8x32xf32>
    %cst_13 = arith.constant 1.000000e+00 : f32
    %43 = vector.broadcast %cst_13 : f32 to vector<2x8x8x32xf32>
    %44 = arith.addf %43, %42 : vector<2x8x8x32xf32>
    %45 = arith.mulf %39, %44 : vector<2x8x8x32xf32>
    %46 = vector.shape_cast %32 : vector<2x8x8x32xf32> to vector<128x32xf32>
    %47 = arith.truncf %46 : vector<128x32xf32> to vector<128x32xbf16>
    %c0_14 = arith.constant 0 : index
    %c0_15 = arith.constant 0 : index
    %48 = vector.load %arg4[%c0_14, %c0_15] : memref<32x128xbf16, #tpu.memory_space<vmem>>, vector<32x128xbf16>
    %cst_16 = arith.constant dense<0.000000e+00> : vector<128x128xf32>
    %49 = tpu.matmul %47, %48, %cst_16 {dimension_numbers = #tpu.dot_dimension_numbers<[1], [0], [0], [1], [0, 0, 1, 1], [], []>} : vector<128x32xbf16>, vector<32x128xbf16>, vector<128x128xf32> -> vector<128x128xf32>
    %c0_17 = arith.constant 0 : index
    %c0_18 = arith.constant 0 : index
    %50 = vector.load %arg5[%c0_17, %c0_18] : memref<1x128xf32, #tpu.memory_space<vmem>>, vector<1x128xf32>
    %51 = vector.broadcast %50 : vector<1x128xf32> to vector<128x128xf32>
    %52 = arith.addf %49, %51 : vector<128x128xf32>
    %53 = vector.shape_cast %52 : vector<128x128xf32> to vector<2x64x128xf32>
    %c0_19 = arith.constant 0 : index
    %c0_20 = arith.constant 0 : index
    %c0_21 = arith.constant 0 : index
    %54 = vector.load %arg6[%c0_19, %c0_20, %c0_21] : memref<2x64x128xf32, #tpu.memory_space<vmem>>, vector<2x64x128xf32>
    tpu.vector_store %arg6[%c0_19, %c0_20, %c0_21], %53 {strides = array<i32>} : memref<2x64x128xf32, #tpu.memory_space<vmem>>, vector<2x64x128xf32>,
    %55 = vector.extract_strided_slice %7 {offsets = [0, 0, 0], sizes = [2, 8, 32], strides = [1, 1, 1]} : vector<2x8x192xf32> to vector<2x8x32xf32>
    %56 = vector.extract_strided_slice %7 {offsets = [0, 0, 32], sizes = [2, 8, 32], strides = [1, 1, 1]} : vector<2x8x192xf32> to vector<2x8x32xf32>
    %57 = vector.extract_strided_slice %7 {offsets = [0, 0, 64], sizes = [2, 8, 32], strides = [1, 1, 1]} : vector<2x8x192xf32> to vector<2x8x32xf32>
    %58 = vector.extract_strided_slice %7 {offsets = [0, 0, 96], sizes = [2, 8, 32], strides = [1, 1, 1]} : vector<2x8x192xf32> to vector<2x8x32xf32>
    %59 = vector.extract_strided_slice %7 {offsets = [0, 0, 128], sizes = [2, 8, 32], strides = [1, 1, 1]} : vector<2x8x192xf32> to vector<2x8x32xf32>
    %60 = vector.extract_strided_slice %7 {offsets = [0, 0, 160], sizes = [2, 8, 32], strides = [1, 1, 1]} : vector<2x8x192xf32> to vector<2x8x32xf32>
    %61 = tpu.concatenate %55, %56, %57, %58, %59, %60 in 1 : vector<2x8x32xf32>, vector<2x8x32xf32>, vector<2x8x32xf32>, vector<2x8x32xf32>, vector<2x8x32xf32>, vector<2x8x32xf32> -> vector<2x48x32xf32>
    %62 = arith.truncf %61 : vector<2x48x32xf32> to vector<2x48x32xbf16>
    %cst_22 = arith.constant 0.000000e+00 : bf16
    %63 = vector.broadcast %cst_22 : bf16 to vector<2x80x32xbf16>
    %64 = tpu.concatenate %62, %63 in 1 : vector<2x48x32xbf16>, vector<2x80x32xbf16> -> vector<2x128x32xbf16>
    %65 = vector.shape_cast %45 : vector<2x8x8x32xf32> to vector<2x64x32xf32>
    %66 = arith.truncf %65 : vector<2x64x32xf32> to vector<2x64x32xbf16>
    %cst_23 = arith.constant dense<0.000000e+00> : vector<2x64x128xf32>
    %67 = tpu.matmul %66, %64, %cst_23 {dimension_numbers = #tpu.dot_dimension_numbers<[2], [2], [1], [1], [0, 0, 0, 1, 1, 1], [0], [0]>} : vector<2x64x32xbf16>, vector<2x128x32xbf16>, vector<2x64x128xf32> -> vector<2x64x128xf32>
    %c0_24 = arith.constant 0 : index
    %c0_25 = arith.constant 0 : index
    %c0_26 = arith.constant 0 : index
    %68 = vector.load %arg7[%c0_24, %c0_25, %c0_26] : memref<2x64x128xf32, #tpu.memory_space<vmem>>, vector<2x64x128xf32>
    tpu.vector_store %arg7[%c0_24, %c0_25, %c0_26], %67 {strides = array<i32>} : memref<2x64x128xf32, #tpu.memory_space<vmem>>, vector<2x64x128xf32>,
    return
  }
}

</mosaic_0001>

<llo_original>
// kernel: tpu_custom_call.1
$region0: #{tpu_custom_call.1}
  #allocation0 [shape = 'u32[]', space=smem, size = 0x4, offset = 0x4, fixed_abs, tag = 'smem constant byte address 0x4 - core index']
  #allocation1 [shape = 'u32[72,128]{1,0:T(1,128)}', space=vmem, size = 0x9000, scoped, tag = 'internal scratch']
  %s0 = inlined_call_operand.hbm [shape: bf16[2,8,32], index: 0, kind: input, shape index: {}]
  %s1 = inlined_call_operand.hbm [shape: bf16[32,320], index: 1, kind: input, shape index: {}]
  %s2 = inlined_call_operand.vmem [shape: f32[1,32], index: 2, kind: input, shape index: {}]
  %s3 = inlined_call_operand.vmem [shape: f32[1,32], index: 3, kind: input, shape index: {}]
  %s4 = inlined_call_operand.hbm [shape: bf16[32,128], index: 4, kind: input, shape index: {}]
  %s5 = inlined_call_operand.vmem [shape: f32[1,128], index: 5, kind: input, shape index: {}]
  %s6 = inlined_call_operand.hbm [shape: f32[2,64,128], index: 6, kind: output, shape index: {0}]
  %s7 = inlined_call_operand.hbm [shape: f32[2,64,128], index: 7, kind: output, shape index: {1}]
  %8 = xla_tuple %s6, %s7
  %s9 = sld [smem:[#allocation0]]
  $region54: #{tpu_custom_call.1} parent=0
    _
  %s11 = ssub.s32 1, %s9
  %s12 = scalar_select 0, %s11, %s9
  $region1: #{tpu_custom_call.1} parent=0
    #allocation2 [shape = 'u8[4096]{0}', space=vmem, size = 0x1000, scoped, tag = 'input window, operand 0, single buffered']
    #allocation3 [shape = 's32[1]{0}', space=sflag, size = 0x4, scoped, tag = 'scoped memory for tpu_custom_call.1']
    #allocation4 [shape = 's32[1]{0}', space=sflag, size = 0x4, scoped, tag = 'scoped memory for tpu_custom_call.1']
    #allocation5 [shape = 'u8[24576]{0}', space=vmem, size = 0x6000, scoped, tag = 'input window, operand 1, single buffered']
    #allocation6 [shape = 's32[1]{0}', space=sflag, size = 0x4, scoped, tag = 'scoped memory for tpu_custom_call.1']
    #allocation7 [shape = 'u8[8192]{0}', space=vmem, size = 0x2000, scoped, tag = 'input window, operand 4, single buffered']
    #allocation8 [shape = 'u8[65536]{0}', space=vmem, size = 0x10000, scoped, tag = 'output window, operand 0, single buffered']
    #allocation9 [shape = 'u8[65536]{0}', space=vmem, size = 0x10000, scoped, tag = 'output window, operand 1, single buffered']
    #allocation10 [shape = 's32[1]{0}', space=sflag, size = 0x4, scoped, tag = 'scoped memory for tpu_custom_call.1']
    %13 = vsyncpa [#allocation3], 0
    %14 = vsyncpa [#allocation6], 0
    %15 = vsyncpa [#allocation4], 0
    %16 = vsyncpa [#allocation10], 0
    // Predicated region
    $region2: #{tpu_custom_call.1} parent=1 // pred_check
      _
    $region3: #{tpu_custom_call.1} parent=1 // pred_check_branch
      %18 = sbr.rel (0) target = $region5
    $region4: #{tpu_custom_call.1} parent=1 // pred_region
      %20 = vsyncadd [#allocation3], 0
      %s21 = sshll.u32 %s0, 4
      %s22 = int_to_ptr.hbm [resolvable:$true] %s21
      %s23 = sshll.u32 [#allocation2], 4
      %s24 = int_to_ptr.vmem [resolvable:$true] %s23
      %29 = dma.hbm_to_vmem [thread:$0]  %s22, 128, %s24, [#allocation3], 64, 64, 4
    $region5: #{tpu_custom_call.1} parent=1 // pred_fallthru
      _
    // Predicated region
    $region6: #{tpu_custom_call.1} parent=1 // pred_check
      _
    $region7: #{tpu_custom_call.1} parent=1 // pred_check_branch
      %31 = sbr.rel (0) target = $region9
    $region8: #{tpu_custom_call.1} parent=1 // pred_region
      %33 = vsyncadd [#allocation6], 0
      %s34 = sshll.u32 %s1, 4
      %s35 = int_to_ptr.hbm [resolvable:$true] %s34
      %s36 = sshll.u32 [#allocation5], 4
      %s37 = int_to_ptr.vmem [resolvable:$true] %s36
      %42 = dma.hbm_to_vmem [thread:$0]  %s35, 768, %s37, [#allocation6], 192, 192, 12
    $region9: #{tpu_custom_call.1} parent=1 // pred_fallthru
      _
    // Predicated region
    $region10: #{tpu_custom_call.1} parent=1 // pred_check
      _
    $region11: #{tpu_custom_call.1} parent=1 // pred_check_branch
      %44 = sbr.rel (0) target = $region13
    $region12: #{tpu_custom_call.1} parent=1 // pred_region
      _
    $region13: #{tpu_custom_call.1} parent=1 // pred_fallthru
      _
    // Predicated region
    $region14: #{tpu_custom_call.1} parent=1 // pred_check
      _
    $region15: #{tpu_custom_call.1} parent=1 // pred_check_branch
      %46 = sbr.rel (0) target = $region17
    $region16: #{tpu_custom_call.1} parent=1 // pred_region
      _
    $region17: #{tpu_custom_call.1} parent=1 // pred_fallthru
      _
    // Predicated region
    $region18: #{tpu_custom_call.1} parent=1 // pred_check
      _
    $region19: #{tpu_custom_call.1} parent=1 // pred_check_branch
      %48 = sbr.rel (0) target = $region21
    $region20: #{tpu_custom_call.1} parent=1 // pred_region
      %50 = vsyncadd [#allocation6], 0
      %s51 = sshll.u32 %s4, 4
      %s52 = int_to_ptr.hbm [resolvable:$true] %s51
      %s53 = sshll.u32 [#allocation7], 4
      %s54 = int_to_ptr.vmem [resolvable:$true] %s53
      %59 = dma.hbm_to_vmem [thread:$0]  %s52, 256, %s54, [#allocation6], 64, 64, 4
    $region21: #{tpu_custom_call.1} parent=1 // pred_fallthru
      _
    // Predicated region
    $region22: #{tpu_custom_call.1} parent=1 // pred_check
      _
    $region23: #{tpu_custom_call.1} parent=1 // pred_check_branch
      %61 = sbr.rel (0) target = $region25
    $region24: #{tpu_custom_call.1} parent=1 // pred_region
      _
    $region25: #{tpu_custom_call.1} parent=1 // pred_fallthru
      _
    // Predicated region
    $region26: #{tpu_custom_call.1} parent=1 // pred_check
      _
    $region27: #{tpu_custom_call.1} parent=1 // pred_check_branch
      %63 = sbr.rel (0) target = $region29
    $region28: #{tpu_custom_call.1} parent=1 // pred_region
      %65 = dma.done [#allocation3], 128
    $region29: #{tpu_custom_call.1} parent=1 // pred_fallthru
      _
    // Predicated region
    $region30: #{tpu_custom_call.1} parent=1 // pred_check
      _
    $region31: #{tpu_custom_call.1} parent=1 // pred_check_branch
      %67 = sbr.rel (0) target = $region33
    $region32: #{tpu_custom_call.1} parent=1 // pred_region
      %69 = dma.done [#allocation6], 768
    $region33: #{tpu_custom_call.1} parent=1 // pred_fallthru
      _
    // Predicated region
    $region34: #{tpu_custom_call.1} parent=1 // pred_check
      _
    $region35: #{tpu_custom_call.1} parent=1 // pred_check_branch
      %71 = sbr.rel (0) target = $region37
    $region36: #{tpu_custom_call.1} parent=1 // pred_region
      %73 = dma.done [#allocation6], 256
    $region37: #{tpu_custom_call.1} parent=1 // pred_fallthru
      _
    %v75 = vld [vmem:[#allocation2] sm:$0xf]
    %v76 = vld [vmem:[#allocation2 + $0x4] sm:$0xf]
    %v77 = vld [vmem:[#allocation5] sm:$0xff]
    %v78 = vld [vmem:[#allocation5 + $0x8] sm:$0xf]
    %v79 = vld [vmem:[#allocation5 + $0xc] sm:$0xff]
    %v80 = vld [vmem:[#allocation5 + $0x14] sm:$0xf]
    %v81 = vld [vmem:[#allocation5 + $0x18] sm:$0xff]
    %v82 = vld [vmem:[#allocation5 + $0x20] sm:$0xf]
    %v83 = vld [vmem:[#allocation5 + $0x24] sm:$0xff]
    %v84 = vld [vmem:[#allocation5 + $0x2c] sm:$0xf]
    %v87 = vunpack.c.l.b16 %v75
    %v88 = vunpack.c.l.b16 %v76
    %v89 = vpack.c.b16 %v88, %v87
    %v98 = vunpack.c.l.b16 %v77
    %v99 = vunpack.c.h.b16 %v77
    %v100 = vunpack.c.l.b16 %v78
    %v101 = vunpack.c.l.b16 %v79
    %v102 = vunpack.c.h.b16 %v79
    %v103 = vunpack.c.l.b16 %v80
    %v104 = vunpack.c.l.b16 %v81
    %v105 = vunpack.c.h.b16 %v81
    %v106 = vunpack.c.l.b16 %v82
    %v107 = vunpack.c.l.b16 %v83
    %v108 = vunpack.c.h.b16 %v83
    %v109 = vunpack.c.l.b16 %v84
    %v110 = vpack.c.b16 %v101, %v98
    %v111 = vpack.c.b16 %v102, %v99
    %v112 = vpack.c.b16 %v103, %v100
    %v113 = vpack.c.b16 %v107, %v104
    %v114 = vpack.c.b16 %v108, %v105
    %v115 = vpack.c.b16 %v109, %v106
    %vm122 = vcmask 261120
    %v124 = vsel %vm122, %v89, 0
    %126 = vmatpush.bf16.msra.mxu0 0
    %127 = vmatpush.bf16.msra.mxu0 0
    %128 = vmatpush.bf16.msra.mxu0 0
    %129 = vmatpush.bf16.msra.mxu0 0
    %130 = vmatpush.bf16.msra.mxu0 0
    %131 = vmatpush.bf16.msra.mxu0 0
    %132 = vmatpush.bf16.msra.mxu0 %v113
    %133 = vmatpush.bf16.msra.mxu0 %v110
    %134 = vmatmul.bf16.gmra.mxu0 %v124
    %v135 = vpop.f32.mrf.mxu0
    %v136 = vadd.f32 0.0, %v135
    %v137 = vpop.f32.mrf.mxu0
    %v138 = vadd.f32 0.0, %v137
    %139 = vdwg.mxu0
    %140 = vmatpush.bf16.msra.mxu0 0
    %141 = vmatpush.bf16.msra.mxu0 0
    %142 = vmatpush.bf16.msra.mxu0 0
    %143 = vmatpush.bf16.msra.mxu0 0
    %144 = vmatpush.bf16.msra.mxu0 0
    %145 = vmatpush.bf16.msra.mxu0 0
    %146 = vmatpush.bf16.msra.mxu0 %v114
    %147 = vmatpush.bf16.msra.mxu0 %v111
    %148 = vmatmul.bf16.gmra.mxu0 %v124
    %v149 = vpop.f32.mrf.mxu0
    %v150 = vadd.f32 0.0, %v149
    %v151 = vpop.f32.mrf.mxu0
    %v152 = vadd.f32 0.0, %v151
    %153 = vdwg.mxu0
    %154 = vmatpush.bf16.msra.mxu0 0
    %155 = vmatpush.bf16.msra.mxu0 0
    %156 = vmatpush.bf16.msra.mxu0 0
    %157 = vmatpush.bf16.msra.mxu0 0
    %158 = vmatpush.bf16.msra.mxu0 0
    %159 = vmatpush.bf16.msra.mxu0 0
    %160 = vmatpush.bf16.msra.mxu0 %v115
    %161 = vmatpush.bf16.msra.mxu0 %v112
    %162 = vmatmul.bf16.gmra.mxu0 %v124
    %v163 = vpop.f32.mrf.mxu0
    %v164 = vadd.f32 0.0, %v163
    %v165 = vpop.f32.mrf.mxu0
    %v166 = vadd.f32 0.0, %v165
    %167 = vdwg.mxu0
    %v168 = vld [vmem:[%s2] sm:$0x1]
    %v170 = vperm.slane %v168, 0
    %v172 = vadd.f32 %v136, %v170
    %v173 = vadd.f32 %v138, %v170
    %v174 = vld [vmem:[%s3] sm:$0x1]
    %v176 = vperm.slane %v174, 0
    %177 = vrot.lane.b32.xlu0 %v176, 64
    %v178 = vpop.permute.xlu0 %177
    %v180 = vadd.f32 %v136, %v178
    %v181 = vadd.f32 %v138, %v178
    %v184 = vrot.slane %v172, 1
    %v185 = vrot.slane %v172, 2
    %v186 = vrot.slane %v172, 3
    %v187 = vrot.slane %v172, 4
    %v188 = vrot.slane %v172, 5
    %v189 = vrot.slane %v172, 6
    %v190 = vrot.slane %v172, 7
    %v191 = vrot.slane %v173, 1
    %v192 = vrot.slane %v173, 2
    %v193 = vrot.slane %v173, 3
    %v194 = vrot.slane %v173, 4
    %v195 = vrot.slane %v173, 5
    %v196 = vrot.slane %v173, 6
    %v197 = vrot.slane %v173, 7
    %v198 = vperm.slane %v172, 0
    %v199 = vperm.slane %v184, 0
    %v200 = vperm.slane %v185, 0
    %v201 = vperm.slane %v186, 0
    %v202 = vperm.slane %v187, 0
    %v203 = vperm.slane %v188, 0
    %v204 = vperm.slane %v189, 0
    %v205 = vperm.slane %v190, 0
    %v206 = vperm.slane %v173, 0
    %v207 = vperm.slane %v191, 0
    %v208 = vperm.slane %v192, 0
    %v209 = vperm.slane %v193, 0
    %v210 = vperm.slane %v194, 0
    %v211 = vperm.slane %v195, 0
    %v212 = vperm.slane %v196, 0
    %v213 = vperm.slane %v197, 0
    %232 = vrot.lane.b32.xlu0 %v136, 96
    %v233 = vpop.permute.xlu0 %232
    %234 = vrot.lane.b32.xlu0 %v138, 96
    %v235 = vpop.permute.xlu0 %234
    %v238 = vadd.f32 %v198, %v233
    %v239 = vadd.f32 %v199, %v233
    %v240 = vadd.f32 %v200, %v233
    %v241 = vadd.f32 %v201, %v233
    %v242 = vadd.f32 %v202, %v233
    %v243 = vadd.f32 %v203, %v233
    %v244 = vadd.f32 %v204, %v233
    %v245 = vadd.f32 %v205, %v233
    %v246 = vadd.f32 %v206, %v235
    %v247 = vadd.f32 %v207, %v235
    %v248 = vadd.f32 %v208, %v235
    %v249 = vadd.f32 %v209, %v235
    %v250 = vadd.f32 %v210, %v235
    %v251 = vadd.f32 %v211, %v235
    %v252 = vadd.f32 %v212, %v235
    %v253 = vadd.f32 %v213, %v235
    %v254 = vmul.f32 %v238, 0.5
    %v255 = vmul.f32 %v239, 0.5
    %v256 = vmul.f32 %v240, 0.5
    %v257 = vmul.f32 %v241, 0.5
    %v258 = vmul.f32 %v242, 0.5
    %v259 = vmul.f32 %v243, 0.5
    %v260 = vmul.f32 %v244, 0.5
    %v261 = vmul.f32 %v245, 0.5
    %v262 = vmul.f32 %v246, 0.5
    %v263 = vmul.f32 %v247, 0.5
    %v264 = vmul.f32 %v248, 0.5
    %v265 = vmul.f32 %v249, 0.5
    %v266 = vmul.f32 %v250, 0.5
    %v267 = vmul.f32 %v251, 0.5
    %v268 = vmul.f32 %v252, 0.5
    %v269 = vmul.f32 %v253, 0.5
    %v270 = vmul.f32 %v238, 0.70710677
    %v271 = vmul.f32 %v239, 0.70710677
    %v272 = vmul.f32 %v240, 0.70710677
    %v273 = vmul.f32 %v241, 0.70710677
    %v274 = vmul.f32 %v242, 0.70710677
    %v275 = vmul.f32 %v243, 0.70710677
    %v276 = vmul.f32 %v244, 0.70710677
    %v277 = vmul.f32 %v245, 0.70710677
    %v278 = vmul.f32 %v246, 0.70710677
    %v279 = vmul.f32 %v247, 0.70710677
    %v280 = vmul.f32 %v248, 0.70710677
    %v281 = vmul.f32 %v249, 0.70710677
    %v282 = vmul.f32 %v250, 0.70710677
    %v283 = vmul.f32 %v251, 0.70710677
    %v284 = vmul.f32 %v252, 0.70710677
    %v285 = vmul.f32 %v253, 0.70710677
    %v286 = vmul.f32 %v270, %v270
    %v287 = vmin.f32 16.0, %v286
    %v288 = vmul.f32 %v287, 2.1237322e-06
    %v289 = vadd.f32 %v288, 0.00028619796
    %v290 = vmul.f32 %v287, %v289
    %v291 = vadd.f32 %v290, 0.0036580483
    %v292 = vmul.f32 %v287, %v291
    %v293 = vadd.f32 %v292, 0.05243302
    %v294 = vmul.f32 %v287, %v293
    %v295 = vadd.f32 %v294, 0.18741608
    %v296 = vmul.f32 %v287, %v295
    %v297 = vadd.f32 %v296, 1.1283791
    %v298 = vmul.f32 %v270, %v297
    %v299 = vmul.f32 %v287, 3.8918573e-05
    %v300 = vadd.f32 %v299, 0.001143296
    %v301 = vmul.f32 %v287, %v300
    %v302 = vadd.f32 %v301, 0.014752088
    %v303 = vmul.f32 %v287, %v302
    %v304 = vadd.f32 %v303, 0.112945676
    %v305 = vmul.f32 %v287, %v304
    %v306 = vadd.f32 %v305, 0.4994258
    %v307 = vmul.f32 %v287, %v306
    %v308 = vadd.f32 %v307, 1.0
    %v309 = vrcp.pop %v308
    %v310 = vmul.f32 %v308, %v309
    %v311 = vsub.f32 1.0, %v310
    %v312 = vmul.f32 %v309, %v311
    %v313 = vadd.f32 %v309, %v312
    %vm314 = vweird.f32 %v308
    %vm315 = vweird.f32 %v309
    %vm316 = vmor %vm314, %vm315
    %v317 = vsel %vm316, %v309, %v313
    %v318 = vand.u32 2147483647, %v308
    %vm319 = vcmp.eq.f32.partialorder %v318, 8.507059e+37
    %v320 = vand.u32 %v308, 2147483648
    %v321 = vor.u32 1.1754944e-38, %v320
    %v322 = vsel %vm319, %v321, %v317
    %v323 = vmul.f32 %v298, %v322
    %v324 = vmin.f32 %v323, 1.0
    %v325 = vmax.f32 %v324, -1.0
    %v326 = vmul.f32 %v271, %v271
    %v327 = vmin.f32 16.0, %v326
    %v328 = vmul.f32 %v327, 2.1237322e-06
    %v329 = vadd.f32 %v328, 0.00028619796
    %v330 = vmul.f32 %v327, %v329
    %v331 = vadd.f32 %v330, 0.0036580483
    %v332 = vmul.f32 %v327, %v331
    %v333 = vadd.f32 %v332, 0.05243302
    %v334 = vmul.f32 %v327, %v333
    %v335 = vadd.f32 %v334, 0.18741608
    %v336 = vmul.f32 %v327, %v335
    %v337 = vadd.f32 %v336, 1.1283791
    %v338 = vmul.f32 %v271, %v337
    %v339 = vmul.f32 %v327, 3.8918573e-05
    %v340 = vadd.f32 %v339, 0.001143296
    %v341 = vmul.f32 %v327, %v340
    %v342 = vadd.f32 %v341, 0.014752088
    %v343 = vmul.f32 %v327, %v342
    %v344 = vadd.f32 %v343, 0.112945676
    %v345 = vmul.f32 %v327, %v344
    %v346 = vadd.f32 %v345, 0.4994258
    %v347 = vmul.f32 %v327, %v346
    %v348 = vadd.f32 %v347, 1.0
    %v349 = vrcp.pop %v348
    %v350 = vmul.f32 %v348, %v349
    %v351 = vsub.f32 1.0, %v350
    %v352 = vmul.f32 %v349, %v351
    %v353 = vadd.f32 %v349, %v352
    %vm354 = vweird.f32 %v348
    %vm355 = vweird.f32 %v349
    %vm356 = vmor %vm354, %vm355
    %v357 = vsel %vm356, %v349, %v353
    %v358 = vand.u32 2147483647, %v348
    %vm359 = vcmp.eq.f32.partialorder %v358, 8.507059e+37
    %v360 = vand.u32 %v348, 2147483648
    %v361 = vor.u32 1.1754944e-38, %v360
    %v362 = vsel %vm359, %v361, %v357
    %v363 = vmul.f32 %v338, %v362
    %v364 = vmin.f32 %v363, 1.0
    %v365 = vmax.f32 %v364, -1.0
    %v366 = vmul.f32 %v272, %v272
    %v367 = vmin.f32 16.0, %v366
    %v368 = vmul.f32 %v367, 2.1237322e-06
    %v369 = vadd.f32 %v368, 0.00028619796
    %v370 = vmul.f32 %v367, %v369
    %v371 = vadd.f32 %v370, 0.0036580483
    %v372 = vmul.f32 %v367, %v371
    %v373 = vadd.f32 %v372, 0.05243302
    %v374 = vmul.f32 %v367, %v373
    %v375 = vadd.f32 %v374, 0.18741608
    %v376 = vmul.f32 %v367, %v375
    %v377 = vadd.f32 %v376, 1.1283791
    %v378 = vmul.f32 %v272, %v377
    %v379 = vmul.f32 %v367, 3.8918573e-05
    %v380 = vadd.f32 %v379, 0.001143296
    %v381 = vmul.f32 %v367, %v380
    %v382 = vadd.f32 %v381, 0.014752088
    %v383 = vmul.f32 %v367, %v382
    %v384 = vadd.f32 %v383, 0.112945676
    %v385 = vmul.f32 %v367, %v384
    %v386 = vadd.f32 %v385, 0.4994258
    %v387 = vmul.f32 %v367, %v386
    %v388 = vadd.f32 %v387, 1.0
    %v389 = vrcp.pop %v388
    %v390 = vmul.f32 %v388, %v389
    %v391 = vsub.f32 1.0, %v390
    %v392 = vmul.f32 %v389, %v391
    %v393 = vadd.f32 %v389, %v392
    %vm394 = vweird.f32 %v388
    %vm395 = vweird.f32 %v389
    %vm396 = vmor %vm394, %vm395
    %v397 = vsel %vm396, %v389, %v393
    %v398 = vand.u32 2147483647, %v388
    %vm399 = vcmp.eq.f32.partialorder %v398, 8.507059e+37
    %v400 = vand.u32 %v388, 2147483648
    %v401 = vor.u32 1.1754944e-38, %v400
    %v402 = vsel %vm399, %v401, %v397
    %v403 = vmul.f32 %v378, %v402
    %v404 = vmin.f32 %v403, 1.0
    %v405 = vmax.f32 %v404, -1.0
    %v406 = vmul.f32 %v273, %v273
    %v407 = vmin.f32 16.0, %v406
    %v408 = vmul.f32 %v407, 2.1237322e-06
    %v409 = vadd.f32 %v408, 0.00028619796
    %v410 = vmul.f32 %v407, %v409
    %v411 = vadd.f32 %v410, 0.0036580483
    %v412 = vmul.f32 %v407, %v411
    %v413 = vadd.f32 %v412, 0.05243302
    %v414 = vmul.f32 %v407, %v413
    %v415 = vadd.f32 %v414, 0.18741608
    %v416 = vmul.f32 %v407, %v415
    %v417 = vadd.f32 %v416, 1.1283791
    %v418 = vmul.f32 %v273, %v417
    %v419 = vmul.f32 %v407, 3.8918573e-05
    %v420 = vadd.f32 %v419, 0.001143296
    %v421 = vmul.f32 %v407, %v420
    %v422 = vadd.f32 %v421, 0.014752088
    %v423 = vmul.f32 %v407, %v422
    %v424 = vadd.f32 %v423, 0.112945676
    %v425 = vmul.f32 %v407, %v424
    %v426 = vadd.f32 %v425, 0.4994258
    %v427 = vmul.f32 %v407, %v426
    %v428 = vadd.f32 %v427, 1.0
    %v429 = vrcp.pop %v428
    %v430 = vmul.f32 %v428, %v429
    %v431 = vsub.f32 1.0, %v430
    %v432 = vmul.f32 %v429, %v431
    %v433 = vadd.f32 %v429, %v432
    %vm434 = vweird.f32 %v428
    %vm435 = vweird.f32 %v429
    %vm436 = vmor %vm434, %vm435
    %v437 = vsel %vm436, %v429, %v433
    %v438 = vand.u32 2147483647, %v428
    %vm439 = vcmp.eq.f32.partialorder %v438, 8.507059e+37
    %v440 = vand.u32 %v428, 2147483648
    %v441 = vor.u32 1.1754944e-38, %v440
    %v442 = vsel %vm439, %v441, %v437
    %v443 = vmul.f32 %v418, %v442
    %v444 = vmin.f32 %v443, 1.0
    %v445 = vmax.f32 %v444, -1.0
    %v446 = vmul.f32 %v274, %v274
    %v447 = vmin.f32 16.0, %v446
    %v448 = vmul.f32 %v447, 2.1237322e-06
    %v449 = vadd.f32 %v448, 0.00028619796
    %v450 = vmul.f32 %v447, %v449
    %v451 = vadd.f32 %v450, 0.0036580483
    %v452 = vmul.f32 %v447, %v451
    %v453 = vadd.f32 %v452, 0.05243302
    %v454 = vmul.f32 %v447, %v453
    %v455 = vadd.f32 %v454, 0.18741608
    %v456 = vmul.f32 %v447, %v455
    %v457 = vadd.f32 %v456, 1.1283791
    %v458 = vmul.f32 %v274, %v457
    %v459 = vmul.f32 %v447, 3.8918573e-05
    %v460 = vadd.f32 %v459, 0.001143296
    %v461 = vmul.f32 %v447, %v460
    %v462 = vadd.f32 %v461, 0.014752088
    %v463 = vmul.f32 %v447, %v462
    %v464 = vadd.f32 %v463, 0.112945676
    %v465 = vmul.f32 %v447, %v464
    %v466 = vadd.f32 %v465, 0.4994258
    %v467 = vmul.f32 %v447, %v466
    %v468 = vadd.f32 %v467, 1.0
    %v469 = vrcp.pop %v468
    %v470 = vmul.f32 %v468, %v469
    %v471 = vsub.f32 1.0, %v470
    %v472 = vmul.f32 %v469, %v471
    %v473 = vadd.f32 %v469, %v472
    %vm474 = vweird.f32 %v468
    %vm475 = vweird.f32 %v469
    %vm476 = vmor %vm474, %vm475
    %v477 = vsel %vm476, %v469, %v473
    %v478 = vand.u32 2147483647, %v468
    %vm479 = vcmp.eq.f32.partialorder %v478, 8.507059e+37
    %v480 = vand.u32 %v468, 2147483648
    %v481 = vor.u32 1.1754944e-38, %v480
    %v482 = vsel %vm479, %v481, %v477
    %v483 = vmul.f32 %v458, %v482
    %v484 = vmin.f32 %v483, 1.0
    %v485 = vmax.f32 %v484, -1.0
    %v486 = vmul.f32 %v275, %v275
    %v487 = vmin.f32 16.0, %v486
    %v488 = vmul.f32 %v487, 2.1237322e-06
    %v489 = vadd.f32 %v488, 0.00028619796
    %v490 = vmul.f32 %v487, %v489
    %v491 = vadd.f32 %v490, 0.0036580483
    %v492 = vmul.f32 %v487, %v491
    %v493 = vadd.f32 %v492, 0.05243302
    %v494 = vmul.f32 %v487, %v493
    %v495 = vadd.f32 %v494, 0.18741608
    %v496 = vmul.f32 %v487, %v495
    %v497 = vadd.f32 %v496, 1.1283791
    %v498 = vmul.f32 %v275, %v497
    %v499 = vmul.f32 %v487, 3.8918573e-05
    %v500 = vadd.f32 %v499, 0.001143296
    %v501 = vmul.f32 %v487, %v500
    %v502 = vadd.f32 %v501, 0.014752088
    %v503 = vmul.f32 %v487, %v502
    %v504 = vadd.f32 %v503, 0.112945676
    %v505 = vmul.f32 %v487, %v504
    %v506 = vadd.f32 %v505, 0.4994258
    %v507 = vmul.f32 %v487, %v506
    %v508 = vadd.f32 %v507, 1.0
    %v509 = vrcp.pop %v508
    %v510 = vmul.f32 %v508, %v509
    %v511 = vsub.f32 1.0, %v510
    %v512 = vmul.f32 %v509, %v511
    %v513 = vadd.f32 %v509, %v512
    %vm514 = vweird.f32 %v508
    %vm515 = vweird.f32 %v509
    %vm516 = vmor %vm514, %vm515
    %v517 = vsel %vm516, %v509, %v513
    %v518 = vand.u32 2147483647, %v508
    %vm519 = vcmp.eq.f32.partialorder %v518, 8.507059e+37
    %v520 = vand.u32 %v508, 2147483648
    %v521 = vor.u32 1.1754944e-38, %v520
    %v522 = vsel %vm519, %v521, %v517
    %v523 = vmul.f32 %v498, %v522
    %v524 = vmin.f32 %v523, 1.0
    %v525 = vmax.f32 %v524, -1.0
    %v526 = vmul.f32 %v276, %v276
    %v527 = vmin.f32 16.0, %v526
    %v528 = vmul.f32 %v527, 2.1237322e-06
    %v529 = vadd.f32 %v528, 0.00028619796
    %v530 = vmul.f32 %v527, %v529
    %v531 = vadd.f32 %v530, 0.0036580483
    %v532 = vmul.f32 %v527, %v531
    %v533 = vadd.f32 %v532, 0.05243302
    %v534 = vmul.f32 %v527, %v533
    %v535 = vadd.f32 %v534, 0.18741608
    %v536 = vmul.f32 %v527, %v535
    %v537 = vadd.f32 %v536, 1.1283791
    %v538 = vmul.f32 %v276, %v537
    %v539 = vmul.f32 %v527, 3.8918573e-05
    %v540 = vadd.f32 %v539, 0.001143296
    %v541 = vmul.f32 %v527, %v540
    %v542 = vadd.f32 %v541, 0.014752088
    %v543 = vmul.f32 %v527, %v542
    %v544 = vadd.f32 %v543, 0.112945676
    %v545 = vmul.f32 %v527, %v544
    %v546 = vadd.f32 %v545, 0.4994258
    %v547 = vmul.f32 %v527, %v546
    %v548 = vadd.f32 %v547, 1.0
    %v549 = vrcp.pop %v548
    %v550 = vmul.f32 %v548, %v549
    %v551 = vsub.f32 1.0, %v550
    %v552 = vmul.f32 %v549, %v551
    %v553 = vadd.f32 %v549, %v552
    %vm554 = vweird.f32 %v548
    %vm555 = vweird.f32 %v549
    %vm556 = vmor %vm554, %vm555
    %v557 = vsel %vm556, %v549, %v553
    %v558 = vand.u32 2147483647, %v548
    %vm559 = vcmp.eq.f32.partialorder %v558, 8.507059e+37
    %v560 = vand.u32 %v548, 2147483648
    %v561 = vor.u32 1.1754944e-38, %v560
    %v562 = vsel %vm559, %v561, %v557
    %v563 = vmul.f32 %v538, %v562
    %v564 = vmin.f32 %v563, 1.0
    %v565 = vmax.f32 %v564, -1.0
    %v566 = vmul.f32 %v277, %v277
    %v567 = vmin.f32 16.0, %v566
    %v568 = vmul.f32 %v567, 2.1237322e-06
    %v569 = vadd.f32 %v568, 0.00028619796
    %v570 = vmul.f32 %v567, %v569
    %v571 = vadd.f32 %v570, 0.0036580483
    %v572 = vmul.f32 %v567, %v571
    %v573 = vadd.f32 %v572, 0.05243302
    %v574 = vmul.f32 %v567, %v573
    %v575 = vadd.f32 %v574, 0.18741608
    %v576 = vmul.f32 %v567, %v575
    %v577 = vadd.f32 %v576, 1.1283791
    %v578 = vmul.f32 %v277, %v577
    %v579 = vmul.f32 %v567, 3.8918573e-05
    %v580 = vadd.f32 %v579, 0.001143296
    %v581 = vmul.f32 %v567, %v580
    %v582 = vadd.f32 %v581, 0.014752088
    %v583 = vmul.f32 %v567, %v582
    %v584 = vadd.f32 %v583, 0.112945676
    %v585 = vmul.f32 %v567, %v584
    %v586 = vadd.f32 %v585, 0.4994258
    %v587 = vmul.f32 %v567, %v586
    %v588 = vadd.f32 %v587, 1.0
    %v589 = vrcp.pop %v588
    %v590 = vmul.f32 %v588, %v589
    %v591 = vsub.f32 1.0, %v590
    %v592 = vmul.f32 %v589, %v591
    %v593 = vadd.f32 %v589, %v592
    %vm594 = vweird.f32 %v588
    %vm595 = vweird.f32 %v589
    %vm596 = vmor %vm594, %vm595
    %v597 = vsel %vm596, %v589, %v593
    %v598 = vand.u32 2147483647, %v588
    %vm599 = vcmp.eq.f32.partialorder %v598, 8.507059e+37
    %v600 = vand.u32 %v588, 2147483648
    %v601 = vor.u32 1.1754944e-38, %v600
    %v602 = vsel %vm599, %v601, %v597
    %v603 = vmul.f32 %v578, %v602
    %v604 = vmin.f32 %v603, 1.0
    %v605 = vmax.f32 %v604, -1.0
    %v606 = vmul.f32 %v278, %v278
    %v607 = vmin.f32 16.0, %v606
    %v608 = vmul.f32 %v607, 2.1237322e-06
    %v609 = vadd.f32 %v608, 0.00028619796
    %v610 = vmul.f32 %v607, %v609
    %v611 = vadd.f32 %v610, 0.0036580483
    %v612 = vmul.f32 %v607, %v611
    %v613 = vadd.f32 %v612, 0.05243302
    %v614 = vmul.f32 %v607, %v613
    %v615 = vadd.f32 %v614, 0.18741608
    %v616 = vmul.f32 %v607, %v615
    %v617 = vadd.f32 %v616, 1.1283791
    %v618 = vmul.f32 %v278, %v617
    %v619 = vmul.f32 %v607, 3.8918573e-05
    %v620 = vadd.f32 %v619, 0.001143296
    %v621 = vmul.f32 %v607, %v620
    %v622 = vadd.f32 %v621, 0.014752088
    %v623 = vmul.f32 %v607, %v622
    %v624 = vadd.f32 %v623, 0.112945676
    %v625 = vmul.f32 %v607, %v624
    %v626 = vadd.f32 %v625, 0.4994258
    %v627 = vmul.f32 %v607, %v626
    %v628 = vadd.f32 %v627, 1.0
    %v629 = vrcp.pop %v628
    %v630 = vmul.f32 %v628, %v629
    %v631 = vsub.f32 1.0, %v630
    %v632 = vmul.f32 %v629, %v631
    %v633 = vadd.f32 %v629, %v632
    %vm634 = vweird.f32 %v628
    %vm635 = vweird.f32 %v629
    %vm636 = vmor %vm634, %vm635
    %v637 = vsel %vm636, %v629, %v633
    %v638 = vand.u32 2147483647, %v628
    %vm639 = vcmp.eq.f32.partialorder %v638, 8.507059e+37
    %v640 = vand.u32 %v628, 2147483648
    %v641 = vor.u32 1.1754944e-38, %v640
    %v642 = vsel %vm639, %v641, %v637
    %v643 = vmul.f32 %v618, %v642
    %v644 = vmin.f32 %v643, 1.0
    %v645 = vmax.f32 %v644, -1.0
    %v646 = vmul.f32 %v279, %v279
    %v647 = vmin.f32 16.0, %v646
    %v648 = vmul.f32 %v647, 2.1237322e-06
    %v649 = vadd.f32 %v648, 0.00028619796
    %v650 = vmul.f32 %v647, %v649
    %v651 = vadd.f32 %v650, 0.0036580483
    %v652 = vmul.f32 %v647, %v651
    %v653 = vadd.f32 %v652, 0.05243302
    %v654 = vmul.f32 %v647, %v653
    %v655 = vadd.f32 %v654, 0.18741608
    %v656 = vmul.f32 %v647, %v655
    %v657 = vadd.f32 %v656, 1.1283791
    %v658 = vmul.f32 %v279, %v657
    %v659 = vmul.f32 %v647, 3.8918573e-05
    %v660 = vadd.f32 %v659, 0.001143296
    %v661 = vmul.f32 %v647, %v660
    %v662 = vadd.f32 %v661, 0.014752088
    %v663 = vmul.f32 %v647, %v662
    %v664 = vadd.f32 %v663, 0.112945676
    %v665 = vmul.f32 %v647, %v664
    %v666 = vadd.f32 %v665, 0.4994258
    %v667 = vmul.f32 %v647, %v666
    %v668 = vadd.f32 %v667, 1.0
    %v669 = vrcp.pop %v668
    %v670 = vmul.f32 %v668, %v669
    %v671 = vsub.f32 1.0, %v670
    %v672 = vmul.f32 %v669, %v671
    %v673 = vadd.f32 %v669, %v672
    %vm674 = vweird.f32 %v668
    %vm675 = vweird.f32 %v669
    %vm676 = vmor %vm674, %vm675
    %v677 = vsel %vm676, %v669, %v673
    %v678 = vand.u32 2147483647, %v668
    %vm679 = vcmp.eq.f32.partialorder %v678, 8.507059e+37
    %v680 = vand.u32 %v668, 2147483648
    %v681 = vor.u32 1.1754944e-38, %v680
    %v682 = vsel %vm679, %v681, %v677
    %v683 = vmul.f32 %v658, %v682
    %v684 = vmin.f32 %v683, 1.0
    %v685 = vmax.f32 %v684, -1.0
    %v686 = vmul.f32 %v280, %v280
    %v687 = vmin.f32 16.0, %v686
    %v688 = vmul.f32 %v687, 2.1237322e-06
    %v689 = vadd.f32 %v688, 0.00028619796
    %v690 = vmul.f32 %v687, %v689
    %v691 = vadd.f32 %v690, 0.0036580483
    %v692 = vmul.f32 %v687, %v691
    %v693 = vadd.f32 %v692, 0.05243302
    %v694 = vmul.f32 %v687, %v693
    %v695 = vadd.f32 %v694, 0.18741608
    %v696 = vmul.f32 %v687, %v695
    %v697 = vadd.f32 %v696, 1.1283791
    %v698 = vmul.f32 %v280, %v697
    %v699 = vmul.f32 %v687, 3.8918573e-05
    %v700 = vadd.f32 %v699, 0.001143296
    %v701 = vmul.f32 %v687, %v700
    %v702 = vadd.f32 %v701, 0.014752088
    %v703 = vmul.f32 %v687, %v702
    %v704 = vadd.f32 %v703, 0.112945676
    %v705 = vmul.f32 %v687, %v704
    %v706 = vadd.f32 %v705, 0.4994258
    %v707 = vmul.f32 %v687, %v706
    %v708 = vadd.f32 %v707, 1.0
    %v709 = vrcp.pop %v708
    %v710 = vmul.f32 %v708, %v709
    %v711 = vsub.f32 1.0, %v710
    %v712 = vmul.f32 %v709, %v711
    %v713 = vadd.f32 %v709, %v712
    %vm714 = vweird.f32 %v708
    %vm715 = vweird.f32 %v709
    %vm716 = vmor %vm714, %vm715
    %v717 = vsel %vm716, %v709, %v713
    %v718 = vand.u32 2147483647, %v708
    %vm719 = vcmp.eq.f32.partialorder %v718, 8.507059e+37
    %v720 = vand.u32 %v708, 2147483648
    %v721 = vor.u32 1.1754944e-38, %v720
    %v722 = vsel %vm719, %v721, %v717
    %v723 = vmul.f32 %v698, %v722
    %v724 = vmin.f32 %v723, 1.0
    %v725 = vmax.f32 %v724, -1.0
    %v726 = vmul.f32 %v281, %v281
    %v727 = vmin.f32 16.0, %v726
    %v728 = vmul.f32 %v727, 2.1237322e-06
    %v729 = vadd.f32 %v728, 0.00028619796
    %v730 = vmul.f32 %v727, %v729
    %v731 = vadd.f32 %v730, 0.0036580483
    %v732 = vmul.f32 %v727, %v731
    %v733 = vadd.f32 %v732, 0.05243302
    %v734 = vmul.f32 %v727, %v733
    %v735 = vadd.f32 %v734, 0.18741608
    %v736 = vmul.f32 %v727, %v735
    %v737 = vadd.f32 %v736, 1.1283791
    %v738 = vmul.f32 %v281, %v737
    %v739 = vmul.f32 %v727, 3.8918573e-05
    %v740 = vadd.f32 %v739, 0.001143296
    %v741 = vmul.f32 %v727, %v740
    %v742 = vadd.f32 %v741, 0.014752088
    %v743 = vmul.f32 %v727, %v742
    %v744 = vadd.f32 %v743, 0.112945676
    %v745 = vmul.f32 %v727, %v744
    %v746 = vadd.f32 %v745, 0.4994258
    %v747 = vmul.f32 %v727, %v746
    %v748 = vadd.f32 %v747, 1.0
    %v749 = vrcp.pop %v748
    %v750 = vmul.f32 %v748, %v749
    %v751 = vsub.f32 1.0, %v750
    %v752 = vmul.f32 %v749, %v751
    %v753 = vadd.f32 %v749, %v752
    %vm754 = vweird.f32 %v748
    %vm755 = vweird.f32 %v749
    %vm756 = vmor %vm754, %vm755
    %v757 = vsel %vm756, %v749, %v753
    %v758 = vand.u32 2147483647, %v748
    %vm759 = vcmp.eq.f32.partialorder %v758, 8.507059e+37
    %v760 = vand.u32 %v748, 2147483648
    %v761 = vor.u32 1.1754944e-38, %v760
    %v762 = vsel %vm759, %v761, %v757
    %v763 = vmul.f32 %v738, %v762
    %v764 = vmin.f32 %v763, 1.0
    %v765 = vmax.f32 %v764, -1.0
    %v766 = vmul.f32 %v282, %v282
    %v767 = vmin.f32 16.0, %v766
    %v768 = vmul.f32 %v767, 2.1237322e-06
    %v769 = vadd.f32 %v768, 0.00028619796
    %v770 = vmul.f32 %v767, %v769
    %v771 = vadd.f32 %v770, 0.0036580483
    %v772 = vmul.f32 %v767, %v771
    %v773 = vadd.f32 %v772, 0.05243302
    %v774 = vmul.f32 %v767, %v773
    %v775 = vadd.f32 %v774, 0.18741608
    %v776 = vmul.f32 %v767, %v775
    %v777 = vadd.f32 %v776, 1.1283791
    %v778 = vmul.f32 %v282, %v777
    %v779 = vmul.f32 %v767, 3.8918573e-05
    %v780 = vadd.f32 %v779, 0.001143296
    %v781 = vmul.f32 %v767, %v780
    %v782 = vadd.f32 %v781, 0.014752088
    %v783 = vmul.f32 %v767, %v782
    %v784 = vadd.f32 %v783, 0.112945676
    %v785 = vmul.f32 %v767, %v784
    %v786 = vadd.f32 %v785, 0.4994258
    %v787 = vmul.f32 %v767, %v786
    %v788 = vadd.f32 %v787, 1.0
    %v789 = vrcp.pop %v788
    %v790 = vmul.f32 %v788, %v789
    %v791 = vsub.f32 1.0, %v790
    %v792 = vmul.f32 %v789, %v791
    %v793 = vadd.f32 %v789, %v792
    %vm794 = vweird.f32 %v788
    %vm795 = vweird.f32 %v789
    %vm796 = vmor %vm794, %vm795
    %v797 = vsel %vm796, %v789, %v793
    %v798 = vand.u32 2147483647, %v788
    %vm799 = vcmp.eq.f32.partialorder %v798, 8.507059e+37
    %v800 = vand.u32 %v788, 2147483648
    %v801 = vor.u32 1.1754944e-38, %v800
    %v802 = vsel %vm799, %v801, %v797
    %v803 = vmul.f32 %v778, %v802
    %v804 = vmin.f32 %v803, 1.0
    %v805 = vmax.f32 %v804, -1.0
    %v806 = vmul.f32 %v283, %v283
    %v807 = vmin.f32 16.0, %v806
    %v808 = vmul.f32 %v807, 2.1237322e-06
    %v809 = vadd.f32 %v808, 0.00028619796
    %v810 = vmul.f32 %v807, %v809
    %v811 = vadd.f32 %v810, 0.0036580483
    %v812 = vmul.f32 %v807, %v811
    %v813 = vadd.f32 %v812, 0.05243302
    %v814 = vmul.f32 %v807, %v813
    %v815 = vadd.f32 %v814, 0.18741608
    %v816 = vmul.f32 %v807, %v815
    %v817 = vadd.f32 %v816, 1.1283791
    %v818 = vmul.f32 %v283, %v817
    %v819 = vmul.f32 %v807, 3.8918573e-05
    %v820 = vadd.f32 %v819, 0.001143296
    %v821 = vmul.f32 %v807, %v820
    %v822 = vadd.f32 %v821, 0.014752088
    %v823 = vmul.f32 %v807, %v822
    %v824 = vadd.f32 %v823, 0.112945676
    %v825 = vmul.f32 %v807, %v824
    %v826 = vadd.f32 %v825, 0.4994258
    %v827 = vmul.f32 %v807, %v826
    %v828 = vadd.f32 %v827, 1.0
    %v829 = vrcp.pop %v828
    %v830 = vmul.f32 %v828, %v829
    %v831 = vsub.f32 1.0, %v830
    %v832 = vmul.f32 %v829, %v831
    %v833 = vadd.f32 %v829, %v832
    %vm834 = vweird.f32 %v828
    %vm835 = vweird.f32 %v829
    %vm836 = vmor %vm834, %vm835
    %v837 = vsel %vm836, %v829, %v833
    %v838 = vand.u32 2147483647, %v828
    %vm839 = vcmp.eq.f32.partialorder %v838, 8.507059e+37
    %v840 = vand.u32 %v828, 2147483648
    %v841 = vor.u32 1.1754944e-38, %v840
    %v842 = vsel %vm839, %v841, %v837
    %v843 = vmul.f32 %v818, %v842
    %v844 = vmin.f32 %v843, 1.0
    %v845 = vmax.f32 %v844, -1.0
    %v846 = vmul.f32 %v284, %v284
    %v847 = vmin.f32 16.0, %v846
    %v848 = vmul.f32 %v847, 2.1237322e-06
    %v849 = vadd.f32 %v848, 0.00028619796
    %v850 = vmul.f32 %v847, %v849
    %v851 = vadd.f32 %v850, 0.0036580483
    %v852 = vmul.f32 %v847, %v851
    %v853 = vadd.f32 %v852, 0.05243302
    %v854 = vmul.f32 %v847, %v853
    %v855 = vadd.f32 %v854, 0.18741608
    %v856 = vmul.f32 %v847, %v855
    %v857 = vadd.f32 %v856, 1.1283791
    %v858 = vmul.f32 %v284, %v857
    %v859 = vmul.f32 %v847, 3.8918573e-05
    %v860 = vadd.f32 %v859, 0.001143296
    %v861 = vmul.f32 %v847, %v860
    %v862 = vadd.f32 %v861, 0.014752088
    %v863 = vmul.f32 %v847, %v862
    %v864 = vadd.f32 %v863, 0.112945676
    %v865 = vmul.f32 %v847, %v864
    %v866 = vadd.f32 %v865, 0.4994258
    %v867 = vmul.f32 %v847, %v866
    %v868 = vadd.f32 %v867, 1.0
    %v869 = vrcp.pop %v868
    %v870 = vmul.f32 %v868, %v869
    %v871 = vsub.f32 1.0, %v870
    %v872 = vmul.f32 %v869, %v871
    %v873 = vadd.f32 %v869, %v872
    %vm874 = vweird.f32 %v868
    %vm875 = vweird.f32 %v869
    %vm876 = vmor %vm874, %vm875
    %v877 = vsel %vm876, %v869, %v873
    %v878 = vand.u32 2147483647, %v868
    %vm879 = vcmp.eq.f32.partialorder %v878, 8.507059e+37
    %v880 = vand.u32 %v868, 2147483648
    %v881 = vor.u32 1.1754944e-38, %v880
    %v882 = vsel %vm879, %v881, %v877
    %v883 = vmul.f32 %v858, %v882
    %v884 = vmin.f32 %v883, 1.0
    %v885 = vmax.f32 %v884, -1.0
    %v886 = vmul.f32 %v285, %v285
    %v887 = vmin.f32 16.0, %v886
    %v888 = vmul.f32 %v887, 2.1237322e-06
    %v889 = vadd.f32 %v888, 0.00028619796
    %v890 = vmul.f32 %v887, %v889
    %v891 = vadd.f32 %v890, 0.0036580483
    %v892 = vmul.f32 %v887, %v891
    %v893 = vadd.f32 %v892, 0.05243302
    %v894 = vmul.f32 %v887, %v893
    %v895 = vadd.f32 %v894, 0.18741608
    %v896 = vmul.f32 %v887, %v895
    %v897 = vadd.f32 %v896, 1.1283791
    %v898 = vmul.f32 %v285, %v897
    %v899 = vmul.f32 %v887, 3.8918573e-05
    %v900 = vadd.f32 %v899, 0.001143296
    %v901 = vmul.f32 %v887, %v900
    %v902 = vadd.f32 %v901, 0.014752088
    %v903 = vmul.f32 %v887, %v902
    %v904 = vadd.f32 %v903, 0.112945676
    %v905 = vmul.f32 %v887, %v904
    %v906 = vadd.f32 %v905, 0.4994258
    %v907 = vmul.f32 %v887, %v906
    %v908 = vadd.f32 %v907, 1.0
    %v909 = vrcp.pop %v908
    %v910 = vmul.f32 %v908, %v909
    %v911 = vsub.f32 1.0, %v910
    %v912 = vmul.f32 %v909, %v911
    %v913 = vadd.f32 %v909, %v912
    %vm914 = vweird.f32 %v908
    %vm915 = vweird.f32 %v909
    %vm916 = vmor %vm914, %vm915
    %v917 = vsel %vm916, %v909, %v913
    %v918 = vand.u32 2147483647, %v908
    %vm919 = vcmp.eq.f32.partialorder %v918, 8.507059e+37
    %v920 = vand.u32 %v908, 2147483648
    %v921 = vor.u32 1.1754944e-38, %v920
    %v922 = vsel %vm919, %v921, %v917
    %v923 = vmul.f32 %v898, %v922
    %v924 = vmin.f32 %v923, 1.0
    %v925 = vmax.f32 %v924, -1.0
    %v926 = vadd.f32 %v325, 1.0
    %v927 = vadd.f32 %v365, 1.0
    %v928 = vadd.f32 %v405, 1.0
    %v929 = vadd.f32 %v445, 1.0
    %v930 = vadd.f32 %v485, 1.0
    %v931 = vadd.f32 %v525, 1.0
    %v932 = vadd.f32 %v565, 1.0
    %v933 = vadd.f32 %v605, 1.0
    %v934 = vadd.f32 %v645, 1.0
    %v935 = vadd.f32 %v685, 1.0
    %v936 = vadd.f32 %v725, 1.0
    %v937 = vadd.f32 %v765, 1.0
    %v938 = vadd.f32 %v805, 1.0
    %v939 = vadd.f32 %v845, 1.0
    %v940 = vadd.f32 %v885, 1.0
    %v941 = vadd.f32 %v925, 1.0
    %v942 = vmul.f32 %v254, %v926
    %v943 = vmul.f32 %v255, %v927
    %v944 = vmul.f32 %v256, %v928
    %v945 = vmul.f32 %v257, %v929
    %v946 = vmul.f32 %v258, %v930
    %v947 = vmul.f32 %v259, %v931
    %v948 = vmul.f32 %v260, %v932
    %v949 = vmul.f32 %v261, %v933
    %v950 = vmul.f32 %v262, %v934
    %v951 = vmul.f32 %v263, %v935
    %v952 = vmul.f32 %v264, %v936
    %v953 = vmul.f32 %v265, %v937
    %v954 = vmul.f32 %v266, %v938
    %v955 = vmul.f32 %v267, %v939
    %v956 = vmul.f32 %v268, %v940
    %v957 = vmul.f32 %v269, %v941
    %v960 = vrot.slane %v180, 1
    %v961 = vrot.slane %v180, 2
    %v962 = vrot.slane %v180, 3
    %v963 = vrot.slane %v180, 4
    %v964 = vrot.slane %v180, 5
    %v965 = vrot.slane %v180, 6
    %v966 = vrot.slane %v180, 7
    %v967 = vrot.slane %v181, 1
    %v968 = vrot.slane %v181, 2
    %v969 = vrot.slane %v181, 3
    %v970 = vrot.slane %v181, 4
    %v971 = vrot.slane %v181, 5
    %v972 = vrot.slane %v181, 6
    %v973 = vrot.slane %v181, 7
    %v974 = vperm.slane %v180, 0
    %v975 = vperm.slane %v960, 0
    %v976 = vperm.slane %v961, 0
    %v977 = vperm.slane %v962, 0
    %v978 = vperm.slane %v963, 0
    %v979 = vperm.slane %v964, 0
    %v980 = vperm.slane %v965, 0
    %v981 = vperm.slane %v966, 0
    %v982 = vperm.slane %v181, 0
    %v983 = vperm.slane %v967, 0
    %v984 = vperm.slane %v968, 0
    %v985 = vperm.slane %v969, 0
    %v986 = vperm.slane %v970, 0
    %v987 = vperm.slane %v971, 0
    %v988 = vperm.slane %v972, 0
    %v989 = vperm.slane %v973, 0
    %v1006 = vadd.f32 %v974, %v233
    %v1007 = vadd.f32 %v975, %v233
    %v1008 = vadd.f32 %v976, %v233
    %v1009 = vadd.f32 %v977, %v233
    %v1010 = vadd.f32 %v978, %v233
    %v1011 = vadd.f32 %v979, %v233
    %v1012 = vadd.f32 %v980, %v233
    %v1013 = vadd.f32 %v981, %v233
    %v1014 = vadd.f32 %v982, %v235
    %v1015 = vadd.f32 %v983, %v235
    %v1016 = vadd.f32 %v984, %v235
    %v1017 = vadd.f32 %v985, %v235
    %v1018 = vadd.f32 %v986, %v235
    %v1019 = vadd.f32 %v987, %v235
    %v1020 = vadd.f32 %v988, %v235
    %v1021 = vadd.f32 %v989, %v235
    %v1022 = vmul.f32 %v1006, 0.5
    %v1023 = vmul.f32 %v1007, 0.5
    %v1024 = vmul.f32 %v1008, 0.5
    %v1025 = vmul.f32 %v1009, 0.5
    %v1026 = vmul.f32 %v1010, 0.5
    %v1027 = vmul.f32 %v1011, 0.5
    %v1028 = vmul.f32 %v1012, 0.5
    %v1029 = vmul.f32 %v1013, 0.5
    %v1030 = vmul.f32 %v1014, 0.5
    %v1031 = vmul.f32 %v1015, 0.5
    %v1032 = vmul.f32 %v1016, 0.5
    %v1033 = vmul.f32 %v1017, 0.5
    %v1034 = vmul.f32 %v1018, 0.5
    %v1035 = vmul.f32 %v1019, 0.5
    %v1036 = vmul.f32 %v1020, 0.5
    %v1037 = vmul.f32 %v1021, 0.5
    %v1038 = vmul.f32 %v1006, 0.70710677
    %v1039 = vmul.f32 %v1007, 0.70710677
    %v1040 = vmul.f32 %v1008, 0.70710677
    %v1041 = vmul.f32 %v1009, 0.70710677
    %v1042 = vmul.f32 %v1010, 0.70710677
    %v1043 = vmul.f32 %v1011, 0.70710677
    %v1044 = vmul.f32 %v1012, 0.70710677
    %v1045 = vmul.f32 %v1013, 0.70710677
    %v1046 = vmul.f32 %v1014, 0.70710677
    %v1047 = vmul.f32 %v1015, 0.70710677
    %v1048 = vmul.f32 %v1016, 0.70710677
    %v1049 = vmul.f32 %v1017, 0.70710677
    %v1050 = vmul.f32 %v1018, 0.70710677
    %v1051 = vmul.f32 %v1019, 0.70710677
    %v1052 = vmul.f32 %v1020, 0.70710677
    %v1053 = vmul.f32 %v1021, 0.70710677
    %v1054 = vmul.f32 %v1038, %v1038
    %v1055 = vmin.f32 16.0, %v1054
    %v1056 = vmul.f32 %v1055, 2.1237322e-06
    %v1057 = vadd.f32 %v1056, 0.00028619796
    %v1058 = vmul.f32 %v1055, %v1057
    %v1059 = vadd.f32 %v1058, 0.0036580483
    %v1060 = vmul.f32 %v1055, %v1059
    %v1061 = vadd.f32 %v1060, 0.05243302
    %v1062 = vmul.f32 %v1055, %v1061
    %v1063 = vadd.f32 %v1062, 0.18741608
    %v1064 = vmul.f32 %v1055, %v1063
    %v1065 = vadd.f32 %v1064, 1.1283791
    %v1066 = vmul.f32 %v1038, %v1065
    %v1067 = vmul.f32 %v1055, 3.8918573e-05
    %v1068 = vadd.f32 %v1067, 0.001143296
    %v1069 = vmul.f32 %v1055, %v1068
    %v1070 = vadd.f32 %v1069, 0.014752088
    %v1071 = vmul.f32 %v1055, %v1070
    %v1072 = vadd.f32 %v1071, 0.112945676
    %v1073 = vmul.f32 %v1055, %v1072
    %v1074 = vadd.f32 %v1073, 0.4994258
    %v1075 = vmul.f32 %v1055, %v1074
    %v1076 = vadd.f32 %v1075, 1.0
    %v1077 = vrcp.pop %v1076
    %v1078 = vmul.f32 %v1076, %v1077
    %v1079 = vsub.f32 1.0, %v1078
    %v1080 = vmul.f32 %v1077, %v1079
    %v1081 = vadd.f32 %v1077, %v1080
    %vm1082 = vweird.f32 %v1076
    %vm1083 = vweird.f32 %v1077
    %vm1084 = vmor %vm1082, %vm1083
    %v1085 = vsel %vm1084, %v1077, %v1081
    %v1086 = vand.u32 2147483647, %v1076
    %vm1087 = vcmp.eq.f32.partialorder %v1086, 8.507059e+37
    %v1088 = vand.u32 %v1076, 2147483648
    %v1089 = vor.u32 1.1754944e-38, %v1088
    %v1090 = vsel %vm1087, %v1089, %v1085
    %v1091 = vmul.f32 %v1066, %v1090
    %v1092 = vmin.f32 %v1091, 1.0
    %v1093 = vmax.f32 %v1092, -1.0
    %v1094 = vmul.f32 %v1039, %v1039
    %v1095 = vmin.f32 16.0, %v1094
    %v1096 = vmul.f32 %v1095, 2.1237322e-06
    %v1097 = vadd.f32 %v1096, 0.00028619796
    %v1098 = vmul.f32 %v1095, %v1097
    %v1099 = vadd.f32 %v1098, 0.0036580483
    %v1100 = vmul.f32 %v1095, %v1099
    %v1101 = vadd.f32 %v1100, 0.05243302
    %v1102 = vmul.f32 %v1095, %v1101
    %v1103 = vadd.f32 %v1102, 0.18741608
    %v1104 = vmul.f32 %v1095, %v1103
    %v1105 = vadd.f32 %v1104, 1.1283791
    %v1106 = vmul.f32 %v1039, %v1105
    %v1107 = vmul.f32 %v1095, 3.8918573e-05
    %v1108 = vadd.f32 %v1107, 0.001143296
    %v1109 = vmul.f32 %v1095, %v1108
    %v1110 = vadd.f32 %v1109, 0.014752088
    %v1111 = vmul.f32 %v1095, %v1110
    %v1112 = vadd.f32 %v1111, 0.112945676
    %v1113 = vmul.f32 %v1095, %v1112
    %v1114 = vadd.f32 %v1113, 0.4994258
    %v1115 = vmul.f32 %v1095, %v1114
    %v1116 = vadd.f32 %v1115, 1.0
    %v1117 = vrcp.pop %v1116
    %v1118 = vmul.f32 %v1116, %v1117
    %v1119 = vsub.f32 1.0, %v1118
    %v1120 = vmul.f32 %v1117, %v1119
    %v1121 = vadd.f32 %v1117, %v1120
    %vm1122 = vweird.f32 %v1116
    %vm1123 = vweird.f32 %v1117
    %vm1124 = vmor %vm1122, %vm1123
    %v1125 = vsel %vm1124, %v1117, %v1121
    %v1126 = vand.u32 2147483647, %v1116
    %vm1127 = vcmp.eq.f32.partialorder %v1126, 8.507059e+37
    %v1128 = vand.u32 %v1116, 2147483648
    %v1129 = vor.u32 1.1754944e-38, %v1128
    %v1130 = vsel %vm1127, %v1129, %v1125
    %v1131 = vmul.f32 %v1106, %v1130
    %v1132 = vmin.f32 %v1131, 1.0
    %v1133 = vmax.f32 %v1132, -1.0
    %v1134 = vmul.f32 %v1040, %v1040
    %v1135 = vmin.f32 16.0, %v1134
    %v1136 = vmul.f32 %v1135, 2.1237322e-06
    %v1137 = vadd.f32 %v1136, 0.00028619796
    %v1138 = vmul.f32 %v1135, %v1137
    %v1139 = vadd.f32 %v1138, 0.0036580483
    %v1140 = vmul.f32 %v1135, %v1139
    %v1141 = vadd.f32 %v1140, 0.05243302
    %v1142 = vmul.f32 %v1135, %v1141
    %v1143 = vadd.f32 %v1142, 0.18741608
    %v1144 = vmul.f32 %v1135, %v1143
    %v1145 = vadd.f32 %v1144, 1.1283791
    %v1146 = vmul.f32 %v1040, %v1145
    %v1147 = vmul.f32 %v1135, 3.8918573e-05
    %v1148 = vadd.f32 %v1147, 0.001143296
    %v1149 = vmul.f32 %v1135, %v1148
    %v1150 = vadd.f32 %v1149, 0.014752088
    %v1151 = vmul.f32 %v1135, %v1150
    %v1152 = vadd.f32 %v1151, 0.112945676
    %v1153 = vmul.f32 %v1135, %v1152
    %v1154 = vadd.f32 %v1153, 0.4994258
    %v1155 = vmul.f32 %v1135, %v1154
    %v1156 = vadd.f32 %v1155, 1.0
    %v1157 = vrcp.pop %v1156
    %v1158 = vmul.f32 %v1156, %v1157
    %v1159 = vsub.f32 1.0, %v1158
    %v1160 = vmul.f32 %v1157, %v1159
    %v1161 = vadd.f32 %v1157, %v1160
    %vm1162 = vweird.f32 %v1156
    %vm1163 = vweird.f32 %v1157
    %vm1164 = vmor %vm1162, %vm1163
    %v1165 = vsel %vm1164, %v1157, %v1161
    %v1166 = vand.u32 2147483647, %v1156
    %vm1167 = vcmp.eq.f32.partialorder %v1166, 8.507059e+37
    %v1168 = vand.u32 %v1156, 2147483648
    %v1169 = vor.u32 1.1754944e-38, %v1168
    %v1170 = vsel %vm1167, %v1169, %v1165
    %v1171 = vmul.f32 %v1146, %v1170
    %v1172 = vmin.f32 %v1171, 1.0
    %v1173 = vmax.f32 %v1172, -1.0
    %v1174 = vmul.f32 %v1041, %v1041
    %v1175 = vmin.f32 16.0, %v1174
    %v1176 = vmul.f32 %v1175, 2.1237322e-06
    %v1177 = vadd.f32 %v1176, 0.00028619796
    %v1178 = vmul.f32 %v1175, %v1177
    %v1179 = vadd.f32 %v1178, 0.0036580483
    %v1180 = vmul.f32 %v1175, %v1179
    %v1181 = vadd.f32 %v1180, 0.05243302
    %v1182 = vmul.f32 %v1175, %v1181
    %v1183 = vadd.f32 %v1182, 0.18741608
    %v1184 = vmul.f32 %v1175, %v1183
    %v1185 = vadd.f32 %v1184, 1.1283791
    %v1186 = vmul.f32 %v1041, %v1185
    %v1187 = vmul.f32 %v1175, 3.8918573e-05
    %v1188 = vadd.f32 %v1187, 0.001143296
    %v1189 = vmul.f32 %v1175, %v1188
    %v1190 = vadd.f32 %v1189, 0.014752088
    %v1191 = vmul.f32 %v1175, %v1190
    %v1192 = vadd.f32 %v1191, 0.112945676
    %v1193 = vmul.f32 %v1175, %v1192
    %v1194 = vadd.f32 %v1193, 0.4994258
    %v1195 = vmul.f32 %v1175, %v1194
    %v1196 = vadd.f32 %v1195, 1.0
    %v1197 = vrcp.pop %v1196
    %v1198 = vmul.f32 %v1196, %v1197
    %v1199 = vsub.f32 1.0, %v1198
    %v1200 = vmul.f32 %v1197, %v1199
    %v1201 = vadd.f32 %v1197, %v1200
    %vm1202 = vweird.f32 %v1196
    %vm1203 = vweird.f32 %v1197
    %vm1204 = vmor %vm1202, %vm1203
    %v1205 = vsel %vm1204, %v1197, %v1201
    %v1206 = vand.u32 2147483647, %v1196
    %vm1207 = vcmp.eq.f32.partialorder %v1206, 8.507059e+37
    %v1208 = vand.u32 %v1196, 2147483648
    %v1209 = vor.u32 1.1754944e-38, %v1208
    %v1210 = vsel %vm1207, %v1209, %v1205
    %v1211 = vmul.f32 %v1186, %v1210
    %v1212 = vmin.f32 %v1211, 1.0
    %v1213 = vmax.f32 %v1212, -1.0
    %v1214 = vmul.f32 %v1042, %v1042
    %v1215 = vmin.f32 16.0, %v1214
    %v1216 = vmul.f32 %v1215, 2.1237322e-06
    %v1217 = vadd.f32 %v1216, 0.00028619796
    %v1218 = vmul.f32 %v1215, %v1217
    %v1219 = vadd.f32 %v1218, 0.0036580483
    %v1220 = vmul.f32 %v1215, %v1219
    %v1221 = vadd.f32 %v1220, 0.05243302
    %v1222 = vmul.f32 %v1215, %v1221
    %v1223 = vadd.f32 %v1222, 0.18741608
    %v1224 = vmul.f32 %v1215, %v1223
    %v1225 = vadd.f32 %v1224, 1.1283791
    %v1226 = vmul.f32 %v1042, %v1225
    %v1227 = vmul.f32 %v1215, 3.8918573e-05
    %v1228 = vadd.f32 %v1227, 0.001143296
    %v1229 = vmul.f32 %v1215, %v1228
    %v1230 = vadd.f32 %v1229, 0.014752088
    %v1231 = vmul.f32 %v1215, %v1230
    %v1232 = vadd.f32 %v1231, 0.112945676
    %v1233 = vmul.f32 %v1215, %v1232
    %v1234 = vadd.f32 %v1233, 0.4994258
    %v1235 = vmul.f32 %v1215, %v1234
    %v1236 = vadd.f32 %v1235, 1.0
    %v1237 = vrcp.pop %v1236
    %v1238 = vmul.f32 %v1236, %v1237
    %v1239 = vsub.f32 1.0, %v1238
    %v1240 = vmul.f32 %v1237, %v1239
    %v1241 = vadd.f32 %v1237, %v1240
    %vm1242 = vweird.f32 %v1236
    %vm1243 = vweird.f32 %v1237
    %vm1244 = vmor %vm1242, %vm1243
    %v1245 = vsel %vm1244, %v1237, %v1241
    %v1246 = vand.u32 2147483647, %v1236
    %vm1247 = vcmp.eq.f32.partialorder %v1246, 8.507059e+37
    %v1248 = vand.u32 %v1236, 2147483648
    %v1249 = vor.u32 1.1754944e-38, %v1248
    %v1250 = vsel %vm1247, %v1249, %v1245
    %v1251 = vmul.f32 %v1226, %v1250
    %v1252 = vmin.f32 %v1251, 1.0
    %v1253 = vmax.f32 %v1252, -1.0
    %v1254 = vmul.f32 %v1043, %v1043
    %v1255 = vmin.f32 16.0, %v1254
    %v1256 = vmul.f32 %v1255, 2.1237322e-06
    %v1257 = vadd.f32 %v1256, 0.00028619796
    %v1258 = vmul.f32 %v1255, %v1257
    %v1259 = vadd.f32 %v1258, 0.0036580483
    %v1260 = vmul.f32 %v1255, %v1259
    %v1261 = vadd.f32 %v1260, 0.05243302
    %v1262 = vmul.f32 %v1255, %v1261
    %v1263 = vadd.f32 %v1262, 0.18741608
    %v1264 = vmul.f32 %v1255, %v1263
    %v1265 = vadd.f32 %v1264, 1.1283791
    %v1266 = vmul.f32 %v1043, %v1265
    %v1267 = vmul.f32 %v1255, 3.8918573e-05
    %v1268 = vadd.f32 %v1267, 0.001143296
    %v1269 = vmul.f32 %v1255, %v1268
    %v1270 = vadd.f32 %v1269, 0.014752088
    %v1271 = vmul.f32 %v1255, %v1270
    %v1272 = vadd.f32 %v1271, 0.112945676
    %v1273 = vmul.f32 %v1255, %v1272
    %v1274 = vadd.f32 %v1273, 0.4994258
    %v1275 = vmul.f32 %v1255, %v1274
    %v1276 = vadd.f32 %v1275, 1.0
    %v1277 = vrcp.pop %v1276
    %v1278 = vmul.f32 %v1276, %v1277
    %v1279 = vsub.f32 1.0, %v1278
    %v1280 = vmul.f32 %v1277, %v1279
    %v1281 = vadd.f32 %v1277, %v1280
    %vm1282 = vweird.f32 %v1276
    %vm1283 = vweird.f32 %v1277
    %vm1284 = vmor %vm1282, %vm1283
    %v1285 = vsel %vm1284, %v1277, %v1281
    %v1286 = vand.u32 2147483647, %v1276
    %vm1287 = vcmp.eq.f32.partialorder %v1286, 8.507059e+37
    %v1288 = vand.u32 %v1276, 2147483648
    %v1289 = vor.u32 1.1754944e-38, %v1288
    %v1290 = vsel %vm1287, %v1289, %v1285
    %v1291 = vmul.f32 %v1266, %v1290
    %v1292 = vmin.f32 %v1291, 1.0
    %v1293 = vmax.f32 %v1292, -1.0
    %v1294 = vmul.f32 %v1044, %v1044
    %v1295 = vmin.f32 16.0, %v1294
    %v1296 = vmul.f32 %v1295, 2.1237322e-06
    %v1297 = vadd.f32 %v1296, 0.00028619796
    %v1298 = vmul.f32 %v1295, %v1297
    %v1299 = vadd.f32 %v1298, 0.0036580483
    %v1300 = vmul.f32 %v1295, %v1299
    %v1301 = vadd.f32 %v1300, 0.05243302
    %v1302 = vmul.f32 %v1295, %v1301
    %v1303 = vadd.f32 %v1302, 0.18741608
    %v1304 = vmul.f32 %v1295, %v1303
    %v1305 = vadd.f32 %v1304, 1.1283791
    %v1306 = vmul.f32 %v1044, %v1305
    %v1307 = vmul.f32 %v1295, 3.8918573e-05
    %v1308 = vadd.f32 %v1307, 0.001143296
    %v1309 = vmul.f32 %v1295, %v1308
    %v1310 = vadd.f32 %v1309, 0.014752088
    %v1311 = vmul.f32 %v1295, %v1310
    %v1312 = vadd.f32 %v1311, 0.112945676
    %v1313 = vmul.f32 %v1295, %v1312
    %v1314 = vadd.f32 %v1313, 0.4994258
    %v1315 = vmul.f32 %v1295, %v1314
    %v1316 = vadd.f32 %v1315, 1.0
    %v1317 = vrcp.pop %v1316
    %v1318 = vmul.f32 %v1316, %v1317
    %v1319 = vsub.f32 1.0, %v1318
    %v1320 = vmul.f32 %v1317, %v1319
    %v1321 = vadd.f32 %v1317, %v1320
    %vm1322 = vweird.f32 %v1316
    %vm1323 = vweird.f32 %v1317
    %vm1324 = vmor %vm1322, %vm1323
    %v1325 = vsel %vm1324, %v1317, %v1321
    %v1326 = vand.u32 2147483647, %v1316
    %vm1327 = vcmp.eq.f32.partialorder %v1326, 8.507059e+37
    %v1328 = vand.u32 %v1316, 2147483648
    %v1329 = vor.u32 1.1754944e-38, %v1328
    %v1330 = vsel %vm1327, %v1329, %v1325
    %v1331 = vmul.f32 %v1306, %v1330
    %v1332 = vmin.f32 %v1331, 1.0
    %v1333 = vmax.f32 %v1332, -1.0
    %v1334 = vmul.f32 %v1045, %v1045
    %v1335 = vmin.f32 16.0, %v1334
    %v1336 = vmul.f32 %v1335, 2.1237322e-06
    %v1337 = vadd.f32 %v1336, 0.00028619796
    %v1338 = vmul.f32 %v1335, %v1337
    %v1339 = vadd.f32 %v1338, 0.0036580483
    %v1340 = vmul.f32 %v1335, %v1339
    %v1341 = vadd.f32 %v1340, 0.05243302
    %v1342 = vmul.f32 %v1335, %v1341
    %v1343 = vadd.f32 %v1342, 0.18741608
    %v1344 = vmul.f32 %v1335, %v1343
    %v1345 = vadd.f32 %v1344, 1.1283791
    %v1346 = vmul.f32 %v1045, %v1345
    %v1347 = vmul.f32 %v1335, 3.8918573e-05
    %v1348 = vadd.f32 %v1347, 0.001143296
    %v1349 = vmul.f32 %v1335, %v1348
    %v1350 = vadd.f32 %v1349, 0.014752088
    %v1351 = vmul.f32 %v1335, %v1350
    %v1352 = vadd.f32 %v1351, 0.112945676
    %v1353 = vmul.f32 %v1335, %v1352
    %v1354 = vadd.f32 %v1353, 0.4994258
    %v1355 = vmul.f32 %v1335, %v1354
    %v1356 = vadd.f32 %v1355, 1.0
    %v1357 = vrcp.pop %v1356
    %v1358 = vmul.f32 %v1356, %v1357
    %v1359 = vsub.f32 1.0, %v1358
    %v1360 = vmul.f32 %v1357, %v1359
    %v1361 = vadd.f32 %v1357, %v1360
    %vm1362 = vweird.f32 %v1356
    %vm1363 = vweird.f32 %v1357
    %vm1364 = vmor %vm1362, %vm1363
    %v1365 = vsel %vm1364, %v1357, %v1361
    %v1366 = vand.u32 2147483647, %v1356
    %vm1367 = vcmp.eq.f32.partialorder %v1366, 8.507059e+37
    %v1368 = vand.u32 %v1356, 2147483648
    %v1369 = vor.u32 1.1754944e-38, %v1368
    %v1370 = vsel %vm1367, %v1369, %v1365
    %v1371 = vmul.f32 %v1346, %v1370
    %v1372 = vmin.f32 %v1371, 1.0
    %v1373 = vmax.f32 %v1372, -1.0
    %v1374 = vmul.f32 %v1046, %v1046
    %v1375 = vmin.f32 16.0, %v1374
    %v1376 = vmul.f32 %v1375, 2.1237322e-06
    %v1377 = vadd.f32 %v1376, 0.00028619796
    %v1378 = vmul.f32 %v1375, %v1377
    %v1379 = vadd.f32 %v1378, 0.0036580483
    %v1380 = vmul.f32 %v1375, %v1379
    %v1381 = vadd.f32 %v1380, 0.05243302
    %v1382 = vmul.f32 %v1375, %v1381
    %v1383 = vadd.f32 %v1382, 0.18741608
    %v1384 = vmul.f32 %v1375, %v1383
    %v1385 = vadd.f32 %v1384, 1.1283791
    %v1386 = vmul.f32 %v1046, %v1385
    %v1387 = vmul.f32 %v1375, 3.8918573e-05
    %v1388 = vadd.f32 %v1387, 0.001143296
    %v1389 = vmul.f32 %v1375, %v1388
    %v1390 = vadd.f32 %v1389, 0.014752088
    %v1391 = vmul.f32 %v1375, %v1390
    %v1392 = vadd.f32 %v1391, 0.112945676
    %v1393 = vmul.f32 %v1375, %v1392
    %v1394 = vadd.f32 %v1393, 0.4994258
    %v1395 = vmul.f32 %v1375, %v1394
    %v1396 = vadd.f32 %v1395, 1.0
    %v1397 = vrcp.pop %v1396
    %v1398 = vmul.f32 %v1396, %v1397
    %v1399 = vsub.f32 1.0, %v1398
    %v1400 = vmul.f32 %v1397, %v1399
    %v1401 = vadd.f32 %v1397, %v1400
    %vm1402 = vweird.f32 %v1396
    %vm1403 = vweird.f32 %v1397
    %vm1404 = vmor %vm1402, %vm1403
    %v1405 = vsel %vm1404, %v1397, %v1401
    %v1406 = vand.u32 2147483647, %v1396
    %vm1407 = vcmp.eq.f32.partialorder %v1406, 8.507059e+37
    %v1408 = vand.u32 %v1396, 2147483648
    %v1409 = vor.u32 1.1754944e-38, %v1408
    %v1410 = vsel %vm1407, %v1409, %v1405
    %v1411 = vmul.f32 %v1386, %v1410
    %v1412 = vmin.f32 %v1411, 1.0
    %v1413 = vmax.f32 %v1412, -1.0
    %v1414 = vmul.f32 %v1047, %v1047
    %v1415 = vmin.f32 16.0, %v1414
    %v1416 = vmul.f32 %v1415, 2.1237322e-06
    %v1417 = vadd.f32 %v1416, 0.00028619796
    %v1418 = vmul.f32 %v1415, %v1417
    %v1419 = vadd.f32 %v1418, 0.0036580483
    %v1420 = vmul.f32 %v1415, %v1419
    %v1421 = vadd.f32 %v1420, 0.05243302
    %v1422 = vmul.f32 %v1415, %v1421
    %v1423 = vadd.f32 %v1422, 0.18741608
    %v1424 = vmul.f32 %v1415, %v1423
    %v1425 = vadd.f32 %v1424, 1.1283791
    %v1426 = vmul.f32 %v1047, %v1425
    %v1427 = vmul.f32 %v1415, 3.8918573e-05
    %v1428 = vadd.f32 %v1427, 0.001143296
    %v1429 = vmul.f32 %v1415, %v1428
    %v1430 = vadd.f32 %v1429, 0.014752088
    %v1431 = vmul.f32 %v1415, %v1430
    %v1432 = vadd.f32 %v1431, 0.112945676
    %v1433 = vmul.f32 %v1415, %v1432
    %v1434 = vadd.f32 %v1433, 0.4994258
    %v1435 = vmul.f32 %v1415, %v1434
    %v1436 = vadd.f32 %v1435, 1.0
    %v1437 = vrcp.pop %v1436
    %v1438 = vmul.f32 %v1436, %v1437
    %v1439 = vsub.f32 1.0, %v1438
    %v1440 = vmul.f32 %v1437, %v1439
    %v1441 = vadd.f32 %v1437, %v1440
    %vm1442 = vweird.f32 %v1436
    %vm1443 = vweird.f32 %v1437
    %vm1444 = vmor %vm1442, %vm1443
    %v1445 = vsel %vm1444, %v1437, %v1441
    %v1446 = vand.u32 2147483647, %v1436
    %vm1447 = vcmp.eq.f32.partialorder %v1446, 8.507059e+37
    %v1448 = vand.u32 %v1436, 2147483648
    %v1449 = vor.u32 1.1754944e-38, %v1448
    %v1450 = vsel %vm1447, %v1449, %v1445
    %v1451 = vmul.f32 %v1426, %v1450
    %v1452 = vmin.f32 %v1451, 1.0
    %v1453 = vmax.f32 %v1452, -1.0
    %v1454 = vmul.f32 %v1048, %v1048
    %v1455 = vmin.f32 16.0, %v1454
    %v1456 = vmul.f32 %v1455, 2.1237322e-06
    %v1457 = vadd.f32 %v1456, 0.00028619796
    %v1458 = vmul.f32 %v1455, %v1457
    %v1459 = vadd.f32 %v1458, 0.0036580483
    %v1460 = vmul.f32 %v1455, %v1459
    %v1461 = vadd.f32 %v1460, 0.05243302
    %v1462 = vmul.f32 %v1455, %v1461
    %v1463 = vadd.f32 %v1462, 0.18741608
    %v1464 = vmul.f32 %v1455, %v1463
    %v1465 = vadd.f32 %v1464, 1.1283791
    %v1466 = vmul.f32 %v1048, %v1465
    %v1467 = vmul.f32 %v1455, 3.8918573e-05
    %v1468 = vadd.f32 %v1467, 0.001143296
    %v1469 = vmul.f32 %v1455, %v1468
    %v1470 = vadd.f32 %v1469, 0.014752088
    %v1471 = vmul.f32 %v1455, %v1470
    %v1472 = vadd.f32 %v1471, 0.112945676
    %v1473 = vmul.f32 %v1455, %v1472
    %v1474 = vadd.f32 %v1473, 0.4994258
    %v1475 = vmul.f32 %v1455, %v1474
    %v1476 = vadd.f32 %v1475, 1.0
    %v1477 = vrcp.pop %v1476
    %v1478 = vmul.f32 %v1476, %v1477
    %v1479 = vsub.f32 1.0, %v1478
    %v1480 = vmul.f32 %v1477, %v1479
    %v1481 = vadd.f32 %v1477, %v1480
    %vm1482 = vweird.f32 %v1476
    %vm1483 = vweird.f32 %v1477
    %vm1484 = vmor %vm1482, %vm1483
    %v1485 = vsel %vm1484, %v1477, %v1481
    %v1486 = vand.u32 2147483647, %v1476
    %vm1487 = vcmp.eq.f32.partialorder %v1486, 8.507059e+37
    %v1488 = vand.u32 %v1476, 2147483648
    %v1489 = vor.u32 1.1754944e-38, %v1488
    %v1490 = vsel %vm1487, %v1489, %v1485
    %v1491 = vmul.f32 %v1466, %v1490
    %v1492 = vmin.f32 %v1491, 1.0
    %v1493 = vmax.f32 %v1492, -1.0
    %v1494 = vmul.f32 %v1049, %v1049
    %v1495 = vmin.f32 16.0, %v1494
    %v1496 = vmul.f32 %v1495, 2.1237322e-06
    %v1497 = vadd.f32 %v1496, 0.00028619796
    %v1498 = vmul.f32 %v1495, %v1497
    %v1499 = vadd.f32 %v1498, 0.0036580483
    %v1500 = vmul.f32 %v1495, %v1499
    %v1501 = vadd.f32 %v1500, 0.05243302
    %v1502 = vmul.f32 %v1495, %v1501
    %v1503 = vadd.f32 %v1502, 0.18741608
    %v1504 = vmul.f32 %v1495, %v1503
    %v1505 = vadd.f32 %v1504, 1.1283791
    %v1506 = vmul.f32 %v1049, %v1505
    %v1507 = vmul.f32 %v1495, 3.8918573e-05
    %v1508 = vadd.f32 %v1507, 0.001143296
    %v1509 = vmul.f32 %v1495, %v1508
    %v1510 = vadd.f32 %v1509, 0.014752088
    %v1511 = vmul.f32 %v1495, %v1510
    %v1512 = vadd.f32 %v1511, 0.112945676
    %v1513 = vmul.f32 %v1495, %v1512
    %v1514 = vadd.f32 %v1513, 0.4994258
    %v1515 = vmul.f32 %v1495, %v1514
    %v1516 = vadd.f32 %v1515, 1.0
    %v1517 = vrcp.pop %v1516
    %v1518 = vmul.f32 %v1516, %v1517
    %v1519 = vsub.f32 1.0, %v1518
    %v1520 = vmul.f32 %v1517, %v1519
    %v1521 = vadd.f32 %v1517, %v1520
    %vm1522 = vweird.f32 %v1516
    %vm1523 = vweird.f32 %v1517
    %vm1524 = vmor %vm1522, %vm1523
    %v1525 = vsel %vm1524, %v1517, %v1521
    %v1526 = vand.u32 2147483647, %v1516
    %vm1527 = vcmp.eq.f32.partialorder %v1526, 8.507059e+37
    %v1528 = vand.u32 %v1516, 2147483648
    %v1529 = vor.u32 1.1754944e-38, %v1528
    %v1530 = vsel %vm1527, %v1529, %v1525
    %v1531 = vmul.f32 %v1506, %v1530
    %v1532 = vmin.f32 %v1531, 1.0
    %v1533 = vmax.f32 %v1532, -1.0
    %v1534 = vmul.f32 %v1050, %v1050
    %v1535 = vmin.f32 16.0, %v1534
    %v1536 = vmul.f32 %v1535, 2.1237322e-06
    %v1537 = vadd.f32 %v1536, 0.00028619796
    %v1538 = vmul.f32 %v1535, %v1537
    %v1539 = vadd.f32 %v1538, 0.0036580483
    %v1540 = vmul.f32 %v1535, %v1539
    %v1541 = vadd.f32 %v1540, 0.05243302
    %v1542 = vmul.f32 %v1535, %v1541
    %v1543 = vadd.f32 %v1542, 0.18741608
    %v1544 = vmul.f32 %v1535, %v1543
    %v1545 = vadd.f32 %v1544, 1.1283791
    %v1546 = vmul.f32 %v1050, %v1545
    %v1547 = vmul.f32 %v1535, 3.8918573e-05
    %v1548 = vadd.f32 %v1547, 0.001143296
    %v1549 = vmul.f32 %v1535, %v1548
    %v1550 = vadd.f32 %v1549, 0.014752088
    %v1551 = vmul.f32 %v1535, %v1550
    %v1552 = vadd.f32 %v1551, 0.112945676
    %v1553 = vmul.f32 %v1535, %v1552
    %v1554 = vadd.f32 %v1553, 0.4994258
    %v1555 = vmul.f32 %v1535, %v1554
    %v1556 = vadd.f32 %v1555, 1.0
    %v1557 = vrcp.pop %v1556
    %v1558 = vmul.f32 %v1556, %v1557
    %v1559 = vsub.f32 1.0, %v1558
    %v1560 = vmul.f32 %v1557, %v1559
    %v1561 = vadd.f32 %v1557, %v1560
    %vm1562 = vweird.f32 %v1556
    %vm1563 = vweird.f32 %v1557
    %vm1564 = vmor %vm1562, %vm1563
    %v1565 = vsel %vm1564, %v1557, %v1561
    %v1566 = vand.u32 2147483647, %v1556
    %vm1567 = vcmp.eq.f32.partialorder %v1566, 8.507059e+37
    %v1568 = vand.u32 %v1556, 2147483648
    %v1569 = vor.u32 1.1754944e-38, %v1568
    %v1570 = vsel %vm1567, %v1569, %v1565
    %v1571 = vmul.f32 %v1546, %v1570
    %v1572 = vmin.f32 %v1571, 1.0
    %v1573 = vmax.f32 %v1572, -1.0
    %v1574 = vmul.f32 %v1051, %v1051
    %v1575 = vmin.f32 16.0, %v1574
    %v1576 = vmul.f32 %v1575, 2.1237322e-06
    %v1577 = vadd.f32 %v1576, 0.00028619796
    %v1578 = vmul.f32 %v1575, %v1577
    %v1579 = vadd.f32 %v1578, 0.0036580483
    %v1580 = vmul.f32 %v1575, %v1579
    %v1581 = vadd.f32 %v1580, 0.05243302
    %v1582 = vmul.f32 %v1575, %v1581
    %v1583 = vadd.f32 %v1582, 0.18741608
    %v1584 = vmul.f32 %v1575, %v1583
    %v1585 = vadd.f32 %v1584, 1.1283791
    %v1586 = vmul.f32 %v1051, %v1585
    %v1587 = vmul.f32 %v1575, 3.8918573e-05
    %v1588 = vadd.f32 %v1587, 0.001143296
    %v1589 = vmul.f32 %v1575, %v1588
    %v1590 = vadd.f32 %v1589, 0.014752088
    %v1591 = vmul.f32 %v1575, %v1590
    %v1592 = vadd.f32 %v1591, 0.112945676
    %v1593 = vmul.f32 %v1575, %v1592
    %v1594 = vadd.f32 %v1593, 0.4994258
    %v1595 = vmul.f32 %v1575, %v1594
    %v1596 = vadd.f32 %v1595, 1.0
    %v1597 = vrcp.pop %v1596
    %v1598 = vmul.f32 %v1596, %v1597
    %v1599 = vsub.f32 1.0, %v1598
    %v1600 = vmul.f32 %v1597, %v1599
    %v1601 = vadd.f32 %v1597, %v1600
    %vm1602 = vweird.f32 %v1596
    %vm1603 = vweird.f32 %v1597
    %vm1604 = vmor %vm1602, %vm1603
    %v1605 = vsel %vm1604, %v1597, %v1601
    %v1606 = vand.u32 2147483647, %v1596
    %vm1607 = vcmp.eq.f32.partialorder %v1606, 8.507059e+37
    %v1608 = vand.u32 %v1596, 2147483648
    %v1609 = vor.u32 1.1754944e-38, %v1608
    %v1610 = vsel %vm1607, %v1609, %v1605
    %v1611 = vmul.f32 %v1586, %v1610
    %v1612 = vmin.f32 %v1611, 1.0
    %v1613 = vmax.f32 %v1612, -1.0
    %v1614 = vmul.f32 %v1052, %v1052
    %v1615 = vmin.f32 16.0, %v1614
    %v1616 = vmul.f32 %v1615, 2.1237322e-06
    %v1617 = vadd.f32 %v1616, 0.00028619796
    %v1618 = vmul.f32 %v1615, %v1617
    %v1619 = vadd.f32 %v1618, 0.0036580483
    %v1620 = vmul.f32 %v1615, %v1619
    %v1621 = vadd.f32 %v1620, 0.05243302
    %v1622 = vmul.f32 %v1615, %v1621
    %v1623 = vadd.f32 %v1622, 0.18741608
    %v1624 = vmul.f32 %v1615, %v1623
    %v1625 = vadd.f32 %v1624, 1.1283791
    %v1626 = vmul.f32 %v1052, %v1625
    %v1627 = vmul.f32 %v1615, 3.8918573e-05
    %v1628 = vadd.f32 %v1627, 0.001143296
    %v1629 = vmul.f32 %v1615, %v1628
    %v1630 = vadd.f32 %v1629, 0.014752088
    %v1631 = vmul.f32 %v1615, %v1630
    %v1632 = vadd.f32 %v1631, 0.112945676
    %v1633 = vmul.f32 %v1615, %v1632
    %v1634 = vadd.f32 %v1633, 0.4994258
    %v1635 = vmul.f32 %v1615, %v1634
    %v1636 = vadd.f32 %v1635, 1.0
    %v1637 = vrcp.pop %v1636
    %v1638 = vmul.f32 %v1636, %v1637
    %v1639 = vsub.f32 1.0, %v1638
    %v1640 = vmul.f32 %v1637, %v1639
    %v1641 = vadd.f32 %v1637, %v1640
    %vm1642 = vweird.f32 %v1636
    %vm1643 = vweird.f32 %v1637
    %vm1644 = vmor %vm1642, %vm1643
    %v1645 = vsel %vm1644, %v1637, %v1641
    %v1646 = vand.u32 2147483647, %v1636
    %vm1647 = vcmp.eq.f32.partialorder %v1646, 8.507059e+37
    %v1648 = vand.u32 %v1636, 2147483648
    %v1649 = vor.u32 1.1754944e-38, %v1648
    %v1650 = vsel %vm1647, %v1649, %v1645
    %v1651 = vmul.f32 %v1626, %v1650
    %v1652 = vmin.f32 %v1651, 1.0
    %v1653 = vmax.f32 %v1652, -1.0
    %v1654 = vmul.f32 %v1053, %v1053
    %v1655 = vmin.f32 16.0, %v1654
    %v1656 = vmul.f32 %v1655, 2.1237322e-06
    %v1657 = vadd.f32 %v1656, 0.00028619796
    %v1658 = vmul.f32 %v1655, %v1657
    %v1659 = vadd.f32 %v1658, 0.0036580483
    %v1660 = vmul.f32 %v1655, %v1659
    %v1661 = vadd.f32 %v1660, 0.05243302
    %v1662 = vmul.f32 %v1655, %v1661
    %v1663 = vadd.f32 %v1662, 0.18741608
    %v1664 = vmul.f32 %v1655, %v1663
    %v1665 = vadd.f32 %v1664, 1.1283791
    %v1666 = vmul.f32 %v1053, %v1665
    %v1667 = vmul.f32 %v1655, 3.8918573e-05
    %v1668 = vadd.f32 %v1667, 0.001143296
    %v1669 = vmul.f32 %v1655, %v1668
    %v1670 = vadd.f32 %v1669, 0.014752088
    %v1671 = vmul.f32 %v1655, %v1670
    %v1672 = vadd.f32 %v1671, 0.112945676
    %v1673 = vmul.f32 %v1655, %v1672
    %v1674 = vadd.f32 %v1673, 0.4994258
    %v1675 = vmul.f32 %v1655, %v1674
    %v1676 = vadd.f32 %v1675, 1.0
    %v1677 = vrcp.pop %v1676
    %v1678 = vmul.f32 %v1676, %v1677
    %v1679 = vsub.f32 1.0, %v1678
    %v1680 = vmul.f32 %v1677, %v1679
    %v1681 = vadd.f32 %v1677, %v1680
    %vm1682 = vweird.f32 %v1676
    %vm1683 = vweird.f32 %v1677
    %vm1684 = vmor %vm1682, %vm1683
    %v1685 = vsel %vm1684, %v1677, %v1681
    %v1686 = vand.u32 2147483647, %v1676
    %vm1687 = vcmp.eq.f32.partialorder %v1686, 8.507059e+37
    %v1688 = vand.u32 %v1676, 2147483648
    %v1689 = vor.u32 1.1754944e-38, %v1688
    %v1690 = vsel %vm1687, %v1689, %v1685
    %v1691 = vmul.f32 %v1666, %v1690
    %v1692 = vmin.f32 %v1691, 1.0
    %v1693 = vmax.f32 %v1692, -1.0
    %v1694 = vadd.f32 %v1093, 1.0
    %v1695 = vadd.f32 %v1133, 1.0
    %v1696 = vadd.f32 %v1173, 1.0
    %v1697 = vadd.f32 %v1213, 1.0
    %v1698 = vadd.f32 %v1253, 1.0
    %v1699 = vadd.f32 %v1293, 1.0
    %v1700 = vadd.f32 %v1333, 1.0
    %v1701 = vadd.f32 %v1373, 1.0
    %v1702 = vadd.f32 %v1413, 1.0
    %v1703 = vadd.f32 %v1453, 1.0
    %v1704 = vadd.f32 %v1493, 1.0
    %v1705 = vadd.f32 %v1533, 1.0
    %v1706 = vadd.f32 %v1573, 1.0
    %v1707 = vadd.f32 %v1613, 1.0
    %v1708 = vadd.f32 %v1653, 1.0
    %v1709 = vadd.f32 %v1693, 1.0
    %v1710 = vmul.f32 %v1022, %v1694
    %v1711 = vmul.f32 %v1023, %v1695
    %v1712 = vmul.f32 %v1024, %v1696
    %v1713 = vmul.f32 %v1025, %v1697
    %v1714 = vmul.f32 %v1026, %v1698
    %v1715 = vmul.f32 %v1027, %v1699
    %v1716 = vmul.f32 %v1028, %v1700
    %v1717 = vmul.f32 %v1029, %v1701
    %v1718 = vmul.f32 %v1030, %v1702
    %v1719 = vmul.f32 %v1031, %v1703
    %v1720 = vmul.f32 %v1032, %v1704
    %v1721 = vmul.f32 %v1033, %v1705
    %v1722 = vmul.f32 %v1034, %v1706
    %v1723 = vmul.f32 %v1035, %v1707
    %v1724 = vmul.f32 %v1036, %v1708
    %v1725 = vmul.f32 %v1037, %v1709
    %v1726 = vpack.c.bf16 %v943, %v942
    %v1727 = vpack.c.bf16 %v945, %v944
    %v1728 = vpack.c.bf16 %v947, %v946
    %v1729 = vpack.c.bf16 %v949, %v948
    %v1730 = vpack.c.bf16 %v951, %v950
    %v1731 = vpack.c.bf16 %v953, %v952
    %v1732 = vpack.c.bf16 %v955, %v954
    %v1733 = vpack.c.bf16 %v957, %v956
    %v1734 = vld [vmem:[#allocation7] sm:$0xf]
    %v1735 = vld [vmem:[#allocation7 + $0x4] sm:$0xf]
    %v1736 = vld [vmem:[#allocation7 + $0x8] sm:$0xf]
    %v1737 = vld [vmem:[#allocation7 + $0xc] sm:$0xf]
    %v1738 = vld [vmem:[%s5] sm:$0x1]
    %v1740 = vperm.slane %v1738, 0
    %v1746 = vunpack.c.l.b16 %v1734
    %v1747 = vunpack.c.l.b16 %v1735
    %v1748 = vunpack.c.l.b16 %v1736
    %v1749 = vunpack.c.l.b16 %v1737
    %v1750 = vpack.c.b16 %v1747, %v1746
    %v1751 = vpack.c.b16 %v1749, %v1748
    %v1755 = vsel %vm122, %v1726, 0
    %v1758 = vsel %vm122, %v1727, 0
    %v1761 = vsel %vm122, %v1728, 0
    %v1764 = vsel %vm122, %v1729, 0
    %v1767 = vsel %vm122, %v1730, 0
    %v1770 = vsel %vm122, %v1731, 0
    %v1773 = vsel %vm122, %v1732, 0
    %v1776 = vsel %vm122, %v1733, 0
    %1778 = vmatpush.bf16.msra.mxu0 0
    %1779 = vmatpush.bf16.msra.mxu0 0
    %1780 = vmatpush.bf16.msra.mxu0 0
    %1781 = vmatpush.bf16.msra.mxu0 0
    %1782 = vmatpush.bf16.msra.mxu0 0
    %1783 = vmatpush.bf16.msra.mxu0 0
    %1784 = vmatpush.bf16.msra.mxu0 %v1751
    %1785 = vmatpush.bf16.msra.mxu0 %v1750
    %1786 = vmatmul.bf16.gmra.mxu0 %v1755
    %v1787 = vpop.f32.mrf.mxu0
    %v1788 = vadd.f32 %v1740, %v1787
    %v1789 = vpop.f32.mrf.mxu0
    %v1790 = vadd.f32 %v1740, %v1789
    %1791 = vmatmul.bf16.gmra.mxu0 %v1758
    %v1792 = vpop.f32.mrf.mxu0
    %v1793 = vadd.f32 %v1740, %v1792
    %v1794 = vpop.f32.mrf.mxu0
    %v1795 = vadd.f32 %v1740, %v1794
    %1796 = vmatmul.bf16.gmra.mxu0 %v1761
    %v1797 = vpop.f32.mrf.mxu0
    %v1798 = vadd.f32 %v1740, %v1797
    %v1799 = vpop.f32.mrf.mxu0
    %v1800 = vadd.f32 %v1740, %v1799
    %1801 = vmatmul.bf16.gmra.mxu0 %v1764
    %v1802 = vpop.f32.mrf.mxu0
    %v1803 = vadd.f32 %v1740, %v1802
    %v1804 = vpop.f32.mrf.mxu0
    %v1805 = vadd.f32 %v1740, %v1804
    %1806 = vmatmul.bf16.gmra.mxu0 %v1767
    %v1807 = vpop.f32.mrf.mxu0
    %v1808 = vadd.f32 %v1740, %v1807
    %v1809 = vpop.f32.mrf.mxu0
    %v1810 = vadd.f32 %v1740, %v1809
    %1811 = vmatmul.bf16.gmra.mxu0 %v1770
    %v1812 = vpop.f32.mrf.mxu0
    %v1813 = vadd.f32 %v1740, %v1812
    %v1814 = vpop.f32.mrf.mxu0
    %v1815 = vadd.f32 %v1740, %v1814
    %1816 = vmatmul.bf16.gmra.mxu0 %v1773
    %v1817 = vpop.f32.mrf.mxu0
    %v1818 = vadd.f32 %v1740, %v1817
    %v1819 = vpop.f32.mrf.mxu0
    %v1820 = vadd.f32 %v1740, %v1819
    %1821 = vmatmul.bf16.gmra.mxu0 %v1776
    %v1822 = vpop.f32.mrf.mxu0
    %v1823 = vadd.f32 %v1740, %v1822
    %v1824 = vpop.f32.mrf.mxu0
    %v1825 = vadd.f32 %v1740, %v1824
    %1826 = vdwg.mxu0
    %1827 = vst [vmem:[#allocation8] sm:$0xff] %v1788
    %1828 = vst [vmem:[#allocation8 + $0x8] sm:$0xff] %v1790
    %1829 = vst [vmem:[#allocation8 + $0x10] sm:$0xff] %v1793
    %1830 = vst [vmem:[#allocation8 + $0x18] sm:$0xff] %v1795
    %1831 = vst [vmem:[#allocation8 + $0x20] sm:$0xff] %v1798
    %1832 = vst [vmem:[#allocation8 + $0x28] sm:$0xff] %v1800
    %1833 = vst [vmem:[#allocation8 + $0x30] sm:$0xff] %v1803
    %1834 = vst [vmem:[#allocation8 + $0x38] sm:$0xff] %v1805
    %1835 = vst [vmem:[#allocation8 + $0x40] sm:$0xff] %v1808
    %1836 = vst [vmem:[#allocation8 + $0x48] sm:$0xff] %v1810
    %1837 = vst [vmem:[#allocation8 + $0x50] sm:$0xff] %v1813
    %1838 = vst [vmem:[#allocation8 + $0x58] sm:$0xff] %v1815
    %1839 = vst [vmem:[#allocation8 + $0x60] sm:$0xff] %v1818
    %1840 = vst [vmem:[#allocation8 + $0x68] sm:$0xff] %v1820
    %1841 = vst [vmem:[#allocation8 + $0x70] sm:$0xff] %v1823
    %1842 = vst [vmem:[#allocation8 + $0x78] sm:$0xff] %v1825
    %1845 = vrot.lane.b32.xlu0 %v150, 96
    %v1846 = vpop.permute.xlu0 %1845
    %1847 = vrot.lane.b32.xlu0 %v152, 96
    %v1848 = vpop.permute.xlu0 %1847
    %1851 = vrot.lane.b32.xlu0 %v150, 64
    %v1852 = vpop.permute.xlu0 %1851
    %1853 = vrot.lane.b32.xlu0 %v152, 64
    %v1854 = vpop.permute.xlu0 %1853
    %1857 = vrot.lane.b32.xlu0 %v150, 32
    %v1858 = vpop.permute.xlu0 %1857
    %1859 = vrot.lane.b32.xlu0 %v152, 32
    %v1860 = vpop.permute.xlu0 %1859
    %1865 = vrot.lane.b32.xlu0 %v164, 96
    %v1866 = vpop.permute.xlu0 %1865
    %1867 = vrot.lane.b32.xlu0 %v166, 96
    %v1868 = vpop.permute.xlu0 %1867
    %v1871 = vpack.c.bf16 %v150, %v150
    %v1872 = vpack.c.bf16 %v1846, %v1846
    %v1873 = vpack.c.bf16 %v1852, %v1852
    %v1874 = vpack.c.bf16 %v1858, %v1858
    %v1875 = vpack.c.bf16 %v164, %v164
    %v1876 = vpack.c.bf16 %v1866, %v1866
    %v1877 = vpack.c.bf16 %v152, %v152
    %v1878 = vpack.c.bf16 %v1848, %v1848
    %v1879 = vpack.c.bf16 %v1854, %v1854
    %v1880 = vpack.c.bf16 %v1860, %v1860
    %v1881 = vpack.c.bf16 %v166, %v166
    %v1882 = vpack.c.bf16 %v1868, %v1868
    %v1895 = vunpack.c.l.b16 %v1871
    %v1896 = vunpack.c.l.b16 %v1872
    %v1897 = vunpack.c.l.b16 %v1873
    %v1898 = vunpack.c.l.b16 %v1874
    %v1899 = vunpack.c.l.b16 %v1875
    %v1900 = vunpack.c.l.b16 %v1876
    %v1901 = vunpack.c.l.b16 %v1877
    %v1902 = vunpack.c.l.b16 %v1878
    %v1903 = vunpack.c.l.b16 %v1879
    %v1904 = vunpack.c.l.b16 %v1880
    %v1905 = vunpack.c.l.b16 %v1881
    %v1906 = vunpack.c.l.b16 %v1882
    %v1907 = vpack.c.b16 %v1896, %v1895
    %v1908 = vpack.c.b16 %v1898, %v1897
    %v1909 = vpack.c.b16 %v1900, %v1899
    %v1910 = vpack.c.b16 %v1902, %v1901
    %v1911 = vpack.c.b16 %v1904, %v1903
    %v1912 = vpack.c.b16 %v1906, %v1905
    %v1913 = vpack.c.bf16 %v1710, %v1710
    %v1914 = vpack.c.bf16 %v1711, %v1711
    %v1915 = vpack.c.bf16 %v1712, %v1712
    %v1916 = vpack.c.bf16 %v1713, %v1713
    %v1917 = vpack.c.bf16 %v1714, %v1714
    %v1918 = vpack.c.bf16 %v1715, %v1715
    %v1919 = vpack.c.bf16 %v1716, %v1716
    %v1920 = vpack.c.bf16 %v1717, %v1717
    %v1921 = vpack.c.bf16 %v1718, %v1718
    %v1922 = vpack.c.bf16 %v1719, %v1719
    %v1923 = vpack.c.bf16 %v1720, %v1720
    %v1924 = vpack.c.bf16 %v1721, %v1721
    %v1925 = vpack.c.bf16 %v1722, %v1722
    %v1926 = vpack.c.bf16 %v1723, %v1723
    %v1927 = vpack.c.bf16 %v1724, %v1724
    %v1928 = vpack.c.bf16 %v1725, %v1725
    %v1937 = vunpack.c.l.b16 %v1913
    %v1938 = vunpack.c.l.b16 %v1914
    %v1939 = vunpack.c.l.b16 %v1915
    %v1940 = vunpack.c.l.b16 %v1916
    %v1941 = vunpack.c.l.b16 %v1917
    %v1942 = vunpack.c.l.b16 %v1918
    %v1943 = vunpack.c.l.b16 %v1919
    %v1944 = vunpack.c.l.b16 %v1920
    %v1945 = vpack.c.b16 %v1938, %v1937
    %v1946 = vpack.c.b16 %v1940, %v1939
    %v1947 = vpack.c.b16 %v1942, %v1941
    %v1948 = vpack.c.b16 %v1944, %v1943
    %1949 = vrot.lane.b32.xlu0 %v1945, 64
    %v1950 = vpop.permute.xlu0 %1949
    %1951 = vrot.lane.b32.xlu0 %v1946, 64
    %v1952 = vpop.permute.xlu0 %1951
    %1953 = vrot.lane.b32.xlu0 %v1947, 64
    %v1954 = vpop.permute.xlu0 %1953
    %1955 = vrot.lane.b32.xlu0 %v1948, 64
    %v1956 = vpop.permute.xlu0 %1955
    %v1958 = vsel %vm122, %v1950, 0
    %v1961 = vsel %vm122, %v1952, 0
    %v1964 = vsel %vm122, %v1954, 0
    %v1967 = vsel %vm122, %v1956, 0
    %v1970 = vsel %vm122, %v1907, 0
    %v1973 = vsel %vm122, %v1908, 0
    %v1976 = vsel %vm122, %v1909, 0
    %v1979 = vsel %vm122, 0, 0
    %1981 = vmatpush.bf16.xpose.msra.mxu0 %v1979
    %1982 = vmatpush.bf16.xpose.msra.mxu0 %v1979
    %1983 = vmatpush.bf16.xpose.msra.mxu0 %v1979
    %1984 = vmatpush.bf16.xpose.msra.mxu0 %v1979
    %1985 = vmatpush.bf16.xpose.msra.mxu0 %v1979
    %1986 = vmatpush.bf16.xpose.msra.mxu0 %v1976
    %1987 = vmatpush.bf16.xpose.msra.mxu0 %v1973
    %1988 = vmatpush.bf16.xpose.msra.mxu0 %v1970
    %1989 = vmatmul.bf16.gmra.mxu0 %v1958
    %v1990 = vpop.f32.mrf.mxu0
    %v1991 = vadd.f32 0.0, %v1990
    %v1992 = vpop.f32.mrf.mxu0
    %v1993 = vadd.f32 0.0, %v1992
    %1994 = vmatmul.bf16.gmra.mxu0 %v1961
    %v1995 = vpop.f32.mrf.mxu0
    %v1996 = vadd.f32 0.0, %v1995
    %v1997 = vpop.f32.mrf.mxu0
    %v1998 = vadd.f32 0.0, %v1997
    %1999 = vmatmul.bf16.gmra.mxu0 %v1964
    %v2000 = vpop.f32.mrf.mxu0
    %v2001 = vadd.f32 0.0, %v2000
    %v2002 = vpop.f32.mrf.mxu0
    %v2003 = vadd.f32 0.0, %v2002
    %2004 = vmatmul.bf16.gmra.mxu0 %v1967
    %v2005 = vpop.f32.mrf.mxu0
    %v2006 = vadd.f32 0.0, %v2005
    %v2007 = vpop.f32.mrf.mxu0
    %v2008 = vadd.f32 0.0, %v2007
    %2009 = vdwg.mxu0
    %v2018 = vunpack.c.l.b16 %v1921
    %v2019 = vunpack.c.l.b16 %v1922
    %v2020 = vunpack.c.l.b16 %v1923
    %v2021 = vunpack.c.l.b16 %v1924
    %v2022 = vunpack.c.l.b16 %v1925
    %v2023 = vunpack.c.l.b16 %v1926
    %v2024 = vunpack.c.l.b16 %v1927
    %v2025 = vunpack.c.l.b16 %v1928
    %v2026 = vpack.c.b16 %v2019, %v2018
    %v2027 = vpack.c.b16 %v2021, %v2020
    %v2028 = vpack.c.b16 %v2023, %v2022
    %v2029 = vpack.c.b16 %v2025, %v2024
    %2030 = vrot.lane.b32.xlu0 %v2026, 64
    %v2031 = vpop.permute.xlu0 %2030
    %2032 = vrot.lane.b32.xlu0 %v2027, 64
    %v2033 = vpop.permute.xlu0 %2032
    %2034 = vrot.lane.b32.xlu0 %v2028, 64
    %v2035 = vpop.permute.xlu0 %2034
    %2036 = vrot.lane.b32.xlu0 %v2029, 64
    %v2037 = vpop.permute.xlu0 %2036
    %v2039 = vsel %vm122, %v2031, 0
    %v2042 = vsel %vm122, %v2033, 0
    %v2045 = vsel %vm122, %v2035, 0
    %v2048 = vsel %vm122, %v2037, 0
    %v2051 = vsel %vm122, %v1910, 0
    %v2054 = vsel %vm122, %v1911, 0
    %v2057 = vsel %vm122, %v1912, 0
    %2059 = vmatpush.bf16.xpose.msra.mxu0 %v1979
    %2060 = vmatpush.bf16.xpose.msra.mxu0 %v1979
    %2061 = vmatpush.bf16.xpose.msra.mxu0 %v1979
    %2062 = vmatpush.bf16.xpose.msra.mxu0 %v1979
    %2063 = vmatpush.bf16.xpose.msra.mxu0 %v1979
    %2064 = vmatpush.bf16.xpose.msra.mxu0 %v2057
    %2065 = vmatpush.bf16.xpose.msra.mxu0 %v2054
    %2066 = vmatpush.bf16.xpose.msra.mxu0 %v2051
    %2067 = vmatmul.bf16.gmra.mxu0 %v2039
    %v2068 = vpop.f32.mrf.mxu0
    %v2069 = vadd.f32 0.0, %v2068
    %v2070 = vpop.f32.mrf.mxu0
    %v2071 = vadd.f32 0.0, %v2070
    %2072 = vmatmul.bf16.gmra.mxu0 %v2042
    %v2073 = vpop.f32.mrf.mxu0
    %v2074 = vadd.f32 0.0, %v2073
    %v2075 = vpop.f32.mrf.mxu0
    %v2076 = vadd.f32 0.0, %v2075
    %2077 = vmatmul.bf16.gmra.mxu0 %v2045
    %v2078 = vpop.f32.mrf.mxu0
    %v2079 = vadd.f32 0.0, %v2078
    %v2080 = vpop.f32.mrf.mxu0
    %v2081 = vadd.f32 0.0, %v2080
    %2082 = vmatmul.bf16.gmra.mxu0 %v2048
    %v2083 = vpop.f32.mrf.mxu0
    %v2084 = vadd.f32 0.0, %v2083
    %v2085 = vpop.f32.mrf.mxu0
    %v2086 = vadd.f32 0.0, %v2085
    %2087 = vdwg.mxu0
    %2088 = vst [vmem:[#allocation9] sm:$0xff] %v1991
    %2089 = vst [vmem:[#allocation9 + $0x8] sm:$0xff] %v1993
    %2090 = vst [vmem:[#allocation9 + $0x10] sm:$0xff] %v1996
    %2091 = vst [vmem:[#allocation9 + $0x18] sm:$0xff] %v1998
    %2092 = vst [vmem:[#allocation9 + $0x20] sm:$0xff] %v2001
    %2093 = vst [vmem:[#allocation9 + $0x28] sm:$0xff] %v2003
    %2094 = vst [vmem:[#allocation9 + $0x30] sm:$0xff] %v2006
    %2095 = vst [vmem:[#allocation9 + $0x38] sm:$0xff] %v2008
    %2096 = vst [vmem:[#allocation9 + $0x40] sm:$0xff] %v2069
    %2097 = vst [vmem:[#allocation9 + $0x48] sm:$0xff] %v2071
    %2098 = vst [vmem:[#allocation9 + $0x50] sm:$0xff] %v2074
    %2099 = vst [vmem:[#allocation9 + $0x58] sm:$0xff] %v2076
    %2100 = vst [vmem:[#allocation9 + $0x60] sm:$0xff] %v2079
    %2101 = vst [vmem:[#allocation9 + $0x68] sm:$0xff] %v2081
    %2102 = vst [vmem:[#allocation9 + $0x70] sm:$0xff] %v2084
    %2103 = vst [vmem:[#allocation9 + $0x78] sm:$0xff] %v2086
    // Predicated region
    $region38: #{tpu_custom_call.1} parent=1 // pred_check
      _
    $region39: #{tpu_custom_call.1} parent=1 // pred_check_branch
      %2105 = sbr.rel (0) target = $region41
    $region40: #{tpu_custom_call.1} parent=1 // pred_region
      %2107 = vsyncadd [#allocation4], 0
      %s2108 = sshll.u32 [#allocation8], 4
      %s2109 = int_to_ptr.vmem [resolvable:$true] %s2108
      %s2110 = sshll.u32 %s6, 4
      %s2111 = int_to_ptr.hbm [resolvable:$true] %s2110
      %2116 = dma.vmem_to_hbm [thread:$0]  %s2109, 2048, %s2111, [#allocation4], 128, 128, 8
    $region41: #{tpu_custom_call.1} parent=1 // pred_fallthru
      _
    // Predicated region
    $region42: #{tpu_custom_call.1} parent=1 // pred_check
      _
    $region43: #{tpu_custom_call.1} parent=1 // pred_check_branch
      %2118 = sbr.rel (0) target = $region45
    $region44: #{tpu_custom_call.1} parent=1 // pred_region
      %2120 = vsyncadd [#allocation10], 0
      %s2121 = sshll.u32 [#allocation9], 4
      %s2122 = int_to_ptr.vmem [resolvable:$true] %s2121
      %s2123 = sshll.u32 %s7, 4
      %s2124 = int_to_ptr.hbm [resolvable:$true] %s2123
      %2129 = dma.vmem_to_hbm [thread:$0]  %s2122, 2048, %s2124, [#allocation10], 128, 128, 8
    $region45: #{tpu_custom_call.1} parent=1 // pred_fallthru
      _
    // Predicated region
    $region46: #{tpu_custom_call.1} parent=1 // pred_check
      _
    $region47: #{tpu_custom_call.1} parent=1 // pred_check_branch
      %2131 = sbr.rel (0) target = $region49
    $region48: #{tpu_custom_call.1} parent=1 // pred_region
      %2133 = dma.done [#allocation4], 2048
    $region49: #{tpu_custom_call.1} parent=1 // pred_fallthru
      _
    // Predicated region
    $region50: #{tpu_custom_call.1} parent=1 // pred_check
      _
    $region51: #{tpu_custom_call.1} parent=1 // pred_check_branch
      %2135 = sbr.rel (0) target = $region53
    $region52: #{tpu_custom_call.1} parent=1 // pred_region
      %2137 = dma.done [#allocation10], 2048
    $region53: #{tpu_custom_call.1} parent=1 // pred_fallthru
      _
    %2138 = vsyncpa [#allocation3], 1
    %2139 = vsyncpa [#allocation6], 1
    %2140 = vsyncpa [#allocation4], 1
    %2141 = vsyncpa [#allocation10], 1

</llo_original>
